<compile_context>
chip_gen: v5e
topology: v5e:2x2
jax: 0.10.0
libtpu: 0.0.40
codegen_flags: <defaults>
</compile_context>

<pallas_src>
import jax
import jax.numpy as jnp
import numpy as np
from jax.experimental import pallas as pl
from jax.experimental.pallas import tpu as pltpu

PAD = 128                       # lane-dense width of the per-step output slab
HP = jax.lax.Precision.HIGHEST  # used for the one-time packing & the reference


# ---------------------------------------------------------------------------
# Fused encoder + decoder kernel (single invocation, no grid).
# ---------------------------------------------------------------------------
def _make_fused_kernel(L, T_len, B, H, V, Ta, Tt):
    def kernel(encx_ref, enc_whh_ref, ids0_ref,
               dec_wg_ref, dec_wo_ref, dec_bo_ref, out_ref):
        f32 = jnp.float32

        # ---- hoisted loop-invariants (weights loaded once, iotas/masks once)
        enc_whh = enc_whh_ref[...]                       # (H, 4H)
        dec_wxa = dec_wg_ref[0:2 * V, :]                 # (2V, 4H) emb-proj+bias
        dec_whh = dec_wg_ref[2 * V:, :]                  # (H, 4H)
        dec_wo = dec_wo_ref[...]                         # (H, PAD) [tfc|afc|0]
        dec_bo = jnp.broadcast_to(dec_bo_ref[...], (B, PAD))

        lane2v = jax.lax.broadcasted_iota(jnp.int32, (B, 2 * V), 1)
        lane = jax.lax.broadcasted_iota(jnp.int32, (B, PAD), 1)
        lane_f = lane.astype(f32)
        t_mask = lane < Tt
        a_mask = jnp.logical_and(lane >= Tt, lane < Tt + Ta)
        neg = f32(-1e30)
        big = f32(1e9)

        def lstm_step(gates, c):
            # One full-vreg sigmoid + one full-vreg tanh (2 EUP pushes),
            # then lane-slice.  PyTorch gate order [i, f, g, o].
            sg = jax.nn.sigmoid(gates)
            th = jnp.tanh(gates)
            i = sg[:, 0 * H:1 * H]
            f = sg[:, 1 * H:2 * H]
            g = th[:, 2 * H:3 * H]
            o = sg[:, 3 * H:4 * H]
            c_new = f * c + i * g
            h_new = o * jnp.tanh(c_new)
            return h_new, c_new

        # ------------------ encoder (zero initial state) --------------------
        h = jnp.zeros((B, H), f32)
        c = jnp.zeros((B, H), f32)
        for l in range(L):
            # x@W_ih + b was precomputed outside the recurrence (encx).
            gates = encx_ref[l] + jnp.dot(h, enc_whh,
                                          preferred_element_type=f32)
            h, c = lstm_step(gates, c)

        # ------------------ decoder (autoregressive loop) -------------------
        ids0 = ids0_ref[...]                             # (B, 2) = [a0 | t0]
        a_id = ids0[:, 0:1]
        t_id = ids0[:, 1:2]

        # Row 0 of the output slab is zeros (matches torch.zeros init);
        # argmax of that all-zero row is index 0 (ties -> first index).
        out_ref[0] = jnp.zeros((B, PAD), f32)
        a_prev = jnp.zeros((B, 1), jnp.int32)
        t_prev = jnp.zeros((B, 1), jnp.int32)

        for t in range(1, T_len):
            # Fused embedding gather + input projection + gate bias: a single
            # (B, 2V) one-hot against the pre-multiplied slab.
            # nn.Dropout(0.4) is identity in eval mode.
            sel = jnp.where(lane2v < V, a_id, t_id + V)
            oh = jnp.where(lane2v == sel, 1.0, 0.0).astype(f32)
            gates = (jnp.dot(oh, dec_wxa, preferred_element_type=f32)
                     + jnp.dot(h, dec_whh, preferred_element_type=f32))
            h, c = lstm_step(gates, c)

            # Combined lane-dense output projection [tfc | afc | 0-pad]:
            # one (8,128) unmasked store per step.
            slab = jnp.dot(h, dec_wo, preferred_element_type=f32) + dec_bo
            out_ref[t] = slab

            if t + 1 < T_len:
                # Next step consumes the argmax of row t-1 (the original
                # code's one-step-delayed `aprediction[t - 1]` read).
                a_id = a_prev
                t_id = t_prev
            if t + 2 < T_len:
                # Masked argmax of THIS row; consumed two steps later.
                t_vals = jnp.where(t_mask, slab, neg)
                a_vals = jnp.where(a_mask, slab, neg)
                t_max = jnp.max(t_vals, axis=1, keepdims=True)
                a_max = jnp.max(a_vals, axis=1, keepdims=True)
                t_arg = jnp.min(
                    jnp.where(jnp.logical_and(t_mask, t_vals == t_max),
                              lane_f, big), axis=1, keepdims=True)
                a_arg = jnp.min(
                    jnp.where(jnp.logical_and(a_mask, a_vals == a_max),
                              lane_f - Tt, big), axis=1, keepdims=True)
                a_prev = a_arg.astype(jnp.int32)
                t_prev = t_arg.astype(jnp.int32)

    return kernel


# ---------------------------------------------------------------------------
# Top-level EncoderDecoder forward (eval mode).
# ---------------------------------------------------------------------------
def encoder_decoder_forward(params, input_tokens, target, target_size):
    """input_tokens: (B, L) int32; target: (B, 2, T) int32.
    Returns (aoutputs, toutputs) with shapes (B, Ta, T) and (B, Tt, T)."""
    Ta, Tt = int(target_size[0]), int(target_size[1])
    B = int(target.shape[0])
    T_len = int(target.shape[2])
    L = int(input_tokens.shape[1])
    H = int(params["enc_whh"].shape[0])
    V = (int(params["dec_wg"].shape[0]) - H) // 2
    assert Tt + Ta <= PAD and B % 8 == 0 and T_len >= 2

    # Encoder input projection gathered OUTSIDE the serial recurrence
    # (parallel over L in XLA): rows already include x@W_ih + gate bias.
    enc_x = jnp.take(params["enc_xw"], input_tokens, axis=0)    # (B, L, 4H)
    enc_x = jnp.transpose(enc_x, (1, 0, 2)).astype(jnp.float32)  # (L, B, 4H)

    # Initial token ids folded into one (B, 2) int32 block: [atarget0|ttarget0]
    ids0 = jnp.stack([target[:, 0, 0], target[:, 1, 0]], axis=1).astype(jnp.int32)

    kernel = _make_fused_kernel(L, T_len, B, H, V, Ta, Tt)

    # Advisory cost estimate so XLA schedules this tiny custom call sensibly.
    flops = int(2 * B * (L * H * 4 * H
                         + (T_len - 1) * ((2 * V + H) * 4 * H + H * PAD)))
    trans = int((L + T_len - 1) * (2 * B * 4 * H + B * H))
    bytes_acc = int(4 * (enc_x.size + params["enc_whh"].size + ids0.size
                         + params["dec_wg"].size + params["dec_wo"].size
                         + params["dec_bo"].size + T_len * B * PAD))
    cost = pl.CostEstimate(flops=flops, transcendentals=trans,
                           bytes_accessed=bytes_acc)

    vmem = lambda: pl.BlockSpec(memory_space=pltpu.MemorySpace.VMEM)
    slab = pl.pallas_call(
        kernel,
        out_shape=jax.ShapeDtypeStruct((T_len, B, PAD), jnp.float32),
        in_specs=[vmem() for _ in range(6)],
        out_specs=vmem(),
        cost_estimate=cost,
    )(enc_x, params["enc_whh"], ids0,
      params["dec_wg"], params["dec_wo"], params["dec_bo"])

    # Single transpose + two slices (PyTorch: (T,B,C) -> (B,C,T)).
    slab = jnp.transpose(slab, (1, 2, 0))                 # (B, PAD, T)
    aoutputs = slab[:, Tt:Tt + Ta, :]
    toutputs = slab[:, :Tt, :]
    return aoutputs, toutputs


# ---------------------------------------------------------------------------
# Pure-JAX reference of the same eval-mode forward (HIGHEST matmul precision).
# ---------------------------------------------------------------------------
def encoder_decoder_ref(raw, input_tokens, target, target_size):
    Ta, Tt = int(target_size[0]), int(target_size[1])
    B, _, T_len = target.shape
    H = raw["enc_whh"].shape[0]

    def lstm_cell(xh, w, b, c):
        gates = jnp.dot(xh, w, precision=HP) + b
        i = jax.nn.sigmoid(gates[:, :H])
        f = jax.nn.sigmoid(gates[:, H:2 * H])
        g = jnp.tanh(gates[:, 2 * H:3 * H])
        o = jax.nn.sigmoid(gates[:, 3 * H:])
        c = f * c + i * g
        return o * jnp.tanh(c), c

    enc_w = jnp.concatenate([raw["enc_wih"], raw["enc_whh"]], axis=0)
    dec_w = jnp.concatenate([raw["dec_wih"], raw["dec_whh"]], axis=0)

    x_seq = jnp.transpose(jnp.take(raw["enc_emb"], input_tokens, axis=0),
                          (1, 0, 2))
    h = jnp.zeros((B, H), jnp.float32)
    c = jnp.zeros((B, H), jnp.float32)
    for l in range(x_seq.shape[0]):
        h, c = lstm_cell(jnp.concatenate([x_seq[l], h], -1),
                         enc_w, raw["enc_b"], c)

    emb = raw["dec_emb"]
    toutputs = jnp.zeros((T_len, B, Tt), jnp.float32)
    aoutputs = jnp.zeros((T_len, B, Ta), jnp.float32)
    a_in = target[:, 0, 0]
    t_in = target[:, 1, 0]
    for t in range(1, T_len):
        xh = jnp.concatenate([emb[a_in], emb[t_in], h], -1)
        h, c = lstm_cell(xh, dec_w, raw["dec_b"], c)
        toutputs = toutputs.at[t].set(jnp.dot(h, raw["wt"], precision=HP)
                                      + raw["bt"])
        aoutputs = aoutputs.at[t].set(jnp.dot(h, raw["wa"], precision=HP)
                                      + raw["ba"])
        # faithful to the original code: reads the argmax at row t-1
        a_in = jnp.argmax(aoutputs[t - 1], axis=-1)
        t_in = jnp.argmax(toutputs[t - 1], axis=-1)
    return (jnp.transpose(aoutputs, (1, 2, 0)),
            jnp.transpose(toutputs, (1, 2, 0)))


# ---------------------------------------------------------------------------
# Parameter init (PyTorch-style) + one-time weight packing for the kernel.
# ---------------------------------------------------------------------------
def init_params(key, *, in_vocab, out_vocab, embedding_dim, hidden_dim,
                target_size):
    E, H = embedding_dim, hidden_dim
    Ta, Tt = target_size[0], target_size[1]
    ks = jax.random.split(key, 14)

    def u(k, shape, fan_in):
        b = 1.0 / np.sqrt(fan_in)
        return jax.random.uniform(k, shape, jnp.float32, -b, b)

    raw = {
        # Encoder: nn.Embedding(in_vocab, E) + nn.LSTM(E, H)
        "enc_emb": jax.random.normal(ks[0], (in_vocab, E), jnp.float32),
        "enc_wih": u(ks[1], (E, 4 * H), H),
        "enc_whh": u(ks[2], (H, 4 * H), H),
        "enc_b": u(ks[3], (1, 4 * H), H) + u(ks[4], (1, 4 * H), H),  # b_ih+b_hh
        # Decoder: nn.Embedding(out_vocab, E) + LSTM(2E, H) + tfc/afc Linears
        "dec_emb": jax.random.normal(ks[5], (out_vocab, E), jnp.float32),
        "dec_wih": u(ks[6], (2 * E, 4 * H), H),
        "dec_whh": u(ks[7], (H, 4 * H), H),
        "dec_b": u(ks[8], (1, 4 * H), H) + u(ks[9], (1, 4 * H), H),
        "wt": u(ks[10], (H, Tt), H), "bt": u(ks[11], (1, Tt), H),   # tfc
        "wa": u(ks[12], (H, Ta), H), "ba": u(ks[13], (1, Ta), H),   # afc
    }
    return raw


def pack_params(raw, target_size):
    """One-time packing (perf): fold embeddings/biases into matmul slabs."""
    Ta, Tt = int(target_size[0]), int(target_size[1])
    E = raw["enc_emb"].shape[1]
    H = raw["enc_whh"].shape[0]
    assert Tt + Ta <= PAD

    # Encoder: per-token input projection + gate bias, (in_vocab, 4H).
    enc_xw = jnp.dot(raw["enc_emb"], raw["enc_wih"], precision=HP) + raw["enc_b"]

    # Decoder gate slab (2V+H, 4H):
    #   rows [0:V)   = dec_emb @ W_ih_a + gate bias  (bias folded once here,
    #                  since exactly one a-row is selected per step)
    #   rows [V:2V)  = dec_emb @ W_ih_t
    #   rows [2V:)   = W_hh
    dec_xa = jnp.dot(raw["dec_emb"], raw["dec_wih"][:E, :], precision=HP) \
        + raw["dec_b"]
    dec_xt = jnp.dot(raw["dec_emb"], raw["dec_wih"][E:, :], precision=HP)
    dec_wg = jnp.concatenate([dec_xa, dec_xt, raw["dec_whh"]], axis=0)

    # Lane-dense (H, 128) output slab [tfc | afc | 0-pad] and its bias.
    dec_wo = jnp.zeros((H, PAD), jnp.float32)
    dec_wo = dec_wo.at[:, :Tt].set(raw["wt"]).at[:, Tt:Tt + Ta].set(raw["wa"])
    dec_bo = jnp.zeros((1, PAD), jnp.float32)
    dec_bo = dec_bo.at[:, :Tt].set(raw["bt"]).at[:, Tt:Tt + Ta].set(raw["ba"])

    return {"enc_xw": enc_xw, "enc_whh": raw["enc_whh"],
            "dec_wg": dec_wg, "dec_wo": dec_wo, "dec_bo": dec_bo}


# ---------------------------------------------------------------------------
if __name__ == "__main__":
    B = 8                    # batch (multiple of 8 = f32 sublane)
    L_IN = 5                 # source sequence length
    T_LEN = 7                # target_length
    IN_VOCAB = 32
    OUT_VOCAB = 32
    EMBEDDING_DIM = 16
    HIDDEN_DIM = 32          # 4H == 128 -> gates are exactly one (8,128) vreg
    TARGET_SIZE = (10, 12)   # (afc out, tfc out)

    key = jax.random.PRNGKey(0)
    pkey, k_in, k_tg = jax.random.split(key, 3)
    raw = init_params(pkey, in_vocab=IN_VOCAB, out_vocab=OUT_VOCAB,
                      embedding_dim=EMBEDDING_DIM, hidden_dim=HIDDEN_DIM,
                      target_size=TARGET_SIZE)
    params = jax.tree_util.tree_map(jax.block_until_ready,
                                    pack_params(raw, TARGET_SIZE))

    input_tokens = jax.random.randint(k_in, (B, L_IN), 0, IN_VOCAB,
                                      dtype=jnp.int32)
    # target: (B, 2, T) -> target[:,0,:] = atarget, target[:,1,:] = ttarget
    target = jax.random.randint(k_tg, (B, 2, T_LEN), 0, OUT_VOCAB,
                                dtype=jnp.int32)

    fwd = jax.jit(encoder_decoder_forward, static_argnames=("target_size",))
    aout, tout = jax.block_until_ready(
        fwd(params, input_tokens, target, target_size=TARGET_SIZE))

    assert aout.shape == (B, TARGET_SIZE[0], T_LEN)
    assert tout.shape == (B, TARGET_SIZE[1], T_LEN)

    ra, rt = encoder_decoder_ref(raw, input_tokens, target, TARGET_SIZE)
    np.testing.assert_allclose(np.asarray(aout), np.asarray(ra),
                               rtol=1e-4, atol=1e-4)
    np.testing.assert_allclose(np.asarray(tout), np.asarray(rt),
                               rtol=1e-4, atol=1e-4)

    print("KERNEL_OK")
</pallas_src>

<mosaic_0001>
module attributes {stable_mosaic.version = 11 : i64} {
  func.func @kernel(%arg0: memref<5x8x128xf32, #tpu.memory_space<vmem>>, %arg1: memref<32x128xf32, #tpu.memory_space<vmem>>, %arg2: memref<8x2xi32, #tpu.memory_space<vmem>>, %arg3: memref<96x128xf32, #tpu.memory_space<vmem>>, %arg4: memref<32x128xf32, #tpu.memory_space<vmem>>, %arg5: memref<1x128xf32, #tpu.memory_space<vmem>>, %arg6: memref<7x8x128xf32, #tpu.memory_space<vmem>>) attributes {dimension_semantics = [], scalar_prefetch = 0 : i64, scratch_operands = 0 : i64, tpu.core_type = #tpu.core_type<tc>} {
    %c0 = arith.constant 0 : index
    %c0_0 = arith.constant 0 : index
    %0 = vector.load %arg1[%c0, %c0_0] : memref<32x128xf32, #tpu.memory_space<vmem>>, vector<32x128xf32>
    %c0_1 = arith.constant 0 : index
    %c0_2 = arith.constant 0 : index
    %1 = vector.load %arg3[%c0_1, %c0_2] : memref<96x128xf32, #tpu.memory_space<vmem>>, vector<64x128xf32>
    %c64 = arith.constant 64 : index
    %c0_3 = arith.constant 0 : index
    %2 = vector.load %arg3[%c64, %c0_3] : memref<96x128xf32, #tpu.memory_space<vmem>>, vector<32x128xf32>
    %c0_4 = arith.constant 0 : index
    %c0_5 = arith.constant 0 : index
    %3 = vector.load %arg4[%c0_4, %c0_5] : memref<32x128xf32, #tpu.memory_space<vmem>>, vector<32x128xf32>
    %c0_6 = arith.constant 0 : index
    %c0_7 = arith.constant 0 : index
    %4 = vector.load %arg5[%c0_6, %c0_7] : memref<1x128xf32, #tpu.memory_space<vmem>>, vector<1x128xf32>
    %5 = vector.shape_cast %4 : vector<1x128xf32> to vector<1x128xf32>
    %6 = vector.broadcast %5 : vector<1x128xf32> to vector<8x128xf32>
    %7 = tpu.iota {dimensions = array<i32: 1>} : vector<8x64xi32>
    %8 = tpu.iota {dimensions = array<i32: 1>} : vector<8x128xi32>
    %9 = arith.sitofp %8 : vector<8x128xi32> to vector<8x128xf32>
    %c12_i32 = arith.constant 12 : i32
    %10 = vector.broadcast %c12_i32 : i32 to vector<8x128xi32>
    %11 = arith.cmpi slt, %8, %10 : vector<8x128xi32>
    %c12_i32_8 = arith.constant 12 : i32
    %12 = vector.broadcast %c12_i32_8 : i32 to vector<8x128xi32>
    %13 = arith.cmpi sge, %8, %12 : vector<8x128xi32>
    %c22_i32 = arith.constant 22 : i32
    %14 = vector.broadcast %c22_i32 : i32 to vector<8x128xi32>
    %15 = arith.cmpi slt, %8, %14 : vector<8x128xi32>
    %16 = arith.andi %13, %15 : vector<8x128xi1>
    %cst = arith.constant 0.000000e+00 : f32
    %17 = vector.broadcast %cst : f32 to vector<8x32xf32>
    %cst_9 = arith.constant 0.000000e+00 : f32
    %18 = vector.broadcast %cst_9 : f32 to vector<8x32xf32>
    %c0_10 = arith.constant 0 : index
    %c0_11 = arith.constant 0 : index
    %c0_12 = arith.constant 0 : index
    %19 = vector.load %arg0[%c0_10, %c0_11, %c0_12] : memref<5x8x128xf32, #tpu.memory_space<vmem>>, vector<1x8x128xf32>
    %20 = vector.shape_cast %19 : vector<1x8x128xf32> to vector<8x128xf32>
    %cst_13 = arith.constant dense<0.000000e+00> : vector<8x128xf32>
    %21 = tpu.matmul %17, %0, %cst_13 {dimension_numbers = #tpu.dot_dimension_numbers<[1], [0], [0], [1], [0, 0, 1, 1], [], []>} : vector<8x32xf32>, vector<32x128xf32>, vector<8x128xf32> -> vector<8x128xf32>
    %22 = arith.addf %20, %21 : vector<8x128xf32>
    %23 = arith.negf %22 : vector<8x128xf32>
    %24 = math.exp %23 : vector<8x128xf32>
    %cst_14 = arith.constant 1.000000e+00 : f32
    %25 = vector.broadcast %cst_14 : f32 to vector<8x128xf32>
    %26 = arith.addf %25, %24 : vector<8x128xf32>
    %27 = arith.divf %25, %26 : vector<8x128xf32>
    %28 = math.tanh %22 : vector<8x128xf32>
    %29 = vector.extract_strided_slice %27 {offsets = [0, 0], sizes = [8, 32], strides = [1, 1]} : vector<8x128xf32> to vector<8x32xf32>
    %30 = vector.extract_strided_slice %27 {offsets = [0, 32], sizes = [8, 32], strides = [1, 1]} : vector<8x128xf32> to vector<8x32xf32>
    %31 = vector.extract_strided_slice %28 {offsets = [0, 64], sizes = [8, 32], strides = [1, 1]} : vector<8x128xf32> to vector<8x32xf32>
    %32 = vector.extract_strided_slice %27 {offsets = [0, 96], sizes = [8, 32], strides = [1, 1]} : vector<8x128xf32> to vector<8x32xf32>
    %33 = arith.mulf %30, %18 : vector<8x32xf32>
    %34 = arith.mulf %29, %31 : vector<8x32xf32>
    %35 = arith.addf %33, %34 : vector<8x32xf32>
    %36 = math.tanh %35 : vector<8x32xf32>
    %37 = arith.mulf %32, %36 : vector<8x32xf32>
    %c1 = arith.constant 1 : index
    %c0_15 = arith.constant 0 : index
    %c0_16 = arith.constant 0 : index
    %38 = vector.load %arg0[%c1, %c0_15, %c0_16] : memref<5x8x128xf32, #tpu.memory_space<vmem>>, vector<1x8x128xf32>
    %39 = vector.shape_cast %38 : vector<1x8x128xf32> to vector<8x128xf32>
    %cst_17 = arith.constant dense<0.000000e+00> : vector<8x128xf32>
    %40 = tpu.matmul %37, %0, %cst_17 {dimension_numbers = #tpu.dot_dimension_numbers<[1], [0], [0], [1], [0, 0, 1, 1], [], []>} : vector<8x32xf32>, vector<32x128xf32>, vector<8x128xf32> -> vector<8x128xf32>
    %41 = arith.addf %39, %40 : vector<8x128xf32>
    %42 = arith.negf %41 : vector<8x128xf32>
    %43 = math.exp %42 : vector<8x128xf32>
    %cst_18 = arith.constant 1.000000e+00 : f32
    %44 = vector.broadcast %cst_18 : f32 to vector<8x128xf32>
    %45 = arith.addf %44, %43 : vector<8x128xf32>
    %46 = arith.divf %44, %45 : vector<8x128xf32>
    %47 = math.tanh %41 : vector<8x128xf32>
    %48 = vector.extract_strided_slice %46 {offsets = [0, 0], sizes = [8, 32], strides = [1, 1]} : vector<8x128xf32> to vector<8x32xf32>
    %49 = vector.extract_strided_slice %46 {offsets = [0, 32], sizes = [8, 32], strides = [1, 1]} : vector<8x128xf32> to vector<8x32xf32>
    %50 = vector.extract_strided_slice %47 {offsets = [0, 64], sizes = [8, 32], strides = [1, 1]} : vector<8x128xf32> to vector<8x32xf32>
    %51 = vector.extract_strided_slice %46 {offsets = [0, 96], sizes = [8, 32], strides = [1, 1]} : vector<8x128xf32> to vector<8x32xf32>
    %52 = arith.mulf %49, %35 : vector<8x32xf32>
    %53 = arith.mulf %48, %50 : vector<8x32xf32>
    %54 = arith.addf %52, %53 : vector<8x32xf32>
    %55 = math.tanh %54 : vector<8x32xf32>
    %56 = arith.mulf %51, %55 : vector<8x32xf32>
    %c2 = arith.constant 2 : index
    %c0_19 = arith.constant 0 : index
    %c0_20 = arith.constant 0 : index
    %57 = vector.load %arg0[%c2, %c0_19, %c0_20] : memref<5x8x128xf32, #tpu.memory_space<vmem>>, vector<1x8x128xf32>
    %58 = vector.shape_cast %57 : vector<1x8x128xf32> to vector<8x128xf32>
    %cst_21 = arith.constant dense<0.000000e+00> : vector<8x128xf32>
    %59 = tpu.matmul %56, %0, %cst_21 {dimension_numbers = #tpu.dot_dimension_numbers<[1], [0], [0], [1], [0, 0, 1, 1], [], []>} : vector<8x32xf32>, vector<32x128xf32>, vector<8x128xf32> -> vector<8x128xf32>
    %60 = arith.addf %58, %59 : vector<8x128xf32>
    %61 = arith.negf %60 : vector<8x128xf32>
    %62 = math.exp %61 : vector<8x128xf32>
    %cst_22 = arith.constant 1.000000e+00 : f32
    %63 = vector.broadcast %cst_22 : f32 to vector<8x128xf32>
    %64 = arith.addf %63, %62 : vector<8x128xf32>
    %65 = arith.divf %63, %64 : vector<8x128xf32>
    %66 = math.tanh %60 : vector<8x128xf32>
    %67 = vector.extract_strided_slice %65 {offsets = [0, 0], sizes = [8, 32], strides = [1, 1]} : vector<8x128xf32> to vector<8x32xf32>
    %68 = vector.extract_strided_slice %65 {offsets = [0, 32], sizes = [8, 32], strides = [1, 1]} : vector<8x128xf32> to vector<8x32xf32>
    %69 = vector.extract_strided_slice %66 {offsets = [0, 64], sizes = [8, 32], strides = [1, 1]} : vector<8x128xf32> to vector<8x32xf32>
    %70 = vector.extract_strided_slice %65 {offsets = [0, 96], sizes = [8, 32], strides = [1, 1]} : vector<8x128xf32> to vector<8x32xf32>
    %71 = arith.mulf %68, %54 : vector<8x32xf32>
    %72 = arith.mulf %67, %69 : vector<8x32xf32>
    %73 = arith.addf %71, %72 : vector<8x32xf32>
    %74 = math.tanh %73 : vector<8x32xf32>
    %75 = arith.mulf %70, %74 : vector<8x32xf32>
    %c3 = arith.constant 3 : index
    %c0_23 = arith.constant 0 : index
    %c0_24 = arith.constant 0 : index
    %76 = vector.load %arg0[%c3, %c0_23, %c0_24] : memref<5x8x128xf32, #tpu.memory_space<vmem>>, vector<1x8x128xf32>
    %77 = vector.shape_cast %76 : vector<1x8x128xf32> to vector<8x128xf32>
    %cst_25 = arith.constant dense<0.000000e+00> : vector<8x128xf32>
    %78 = tpu.matmul %75, %0, %cst_25 {dimension_numbers = #tpu.dot_dimension_numbers<[1], [0], [0], [1], [0, 0, 1, 1], [], []>} : vector<8x32xf32>, vector<32x128xf32>, vector<8x128xf32> -> vector<8x128xf32>
    %79 = arith.addf %77, %78 : vector<8x128xf32>
    %80 = arith.negf %79 : vector<8x128xf32>
    %81 = math.exp %80 : vector<8x128xf32>
    %cst_26 = arith.constant 1.000000e+00 : f32
    %82 = vector.broadcast %cst_26 : f32 to vector<8x128xf32>
    %83 = arith.addf %82, %81 : vector<8x128xf32>
    %84 = arith.divf %82, %83 : vector<8x128xf32>
    %85 = math.tanh %79 : vector<8x128xf32>
    %86 = vector.extract_strided_slice %84 {offsets = [0, 0], sizes = [8, 32], strides = [1, 1]} : vector<8x128xf32> to vector<8x32xf32>
    %87 = vector.extract_strided_slice %84 {offsets = [0, 32], sizes = [8, 32], strides = [1, 1]} : vector<8x128xf32> to vector<8x32xf32>
    %88 = vector.extract_strided_slice %85 {offsets = [0, 64], sizes = [8, 32], strides = [1, 1]} : vector<8x128xf32> to vector<8x32xf32>
    %89 = vector.extract_strided_slice %84 {offsets = [0, 96], sizes = [8, 32], strides = [1, 1]} : vector<8x128xf32> to vector<8x32xf32>
    %90 = arith.mulf %87, %73 : vector<8x32xf32>
    %91 = arith.mulf %86, %88 : vector<8x32xf32>
    %92 = arith.addf %90, %91 : vector<8x32xf32>
    %93 = math.tanh %92 : vector<8x32xf32>
    %94 = arith.mulf %89, %93 : vector<8x32xf32>
    %c4 = arith.constant 4 : index
    %c0_27 = arith.constant 0 : index
    %c0_28 = arith.constant 0 : index
    %95 = vector.load %arg0[%c4, %c0_27, %c0_28] : memref<5x8x128xf32, #tpu.memory_space<vmem>>, vector<1x8x128xf32>
    %96 = vector.shape_cast %95 : vector<1x8x128xf32> to vector<8x128xf32>
    %cst_29 = arith.constant dense<0.000000e+00> : vector<8x128xf32>
    %97 = tpu.matmul %94, %0, %cst_29 {dimension_numbers = #tpu.dot_dimension_numbers<[1], [0], [0], [1], [0, 0, 1, 1], [], []>} : vector<8x32xf32>, vector<32x128xf32>, vector<8x128xf32> -> vector<8x128xf32>
    %98 = arith.addf %96, %97 : vector<8x128xf32>
    %99 = arith.negf %98 : vector<8x128xf32>
    %100 = math.exp %99 : vector<8x128xf32>
    %cst_30 = arith.constant 1.000000e+00 : f32
    %101 = vector.broadcast %cst_30 : f32 to vector<8x128xf32>
    %102 = arith.addf %101, %100 : vector<8x128xf32>
    %103 = arith.divf %101, %102 : vector<8x128xf32>
    %104 = math.tanh %98 : vector<8x128xf32>
    %105 = vector.extract_strided_slice %103 {offsets = [0, 0], sizes = [8, 32], strides = [1, 1]} : vector<8x128xf32> to vector<8x32xf32>
    %106 = vector.extract_strided_slice %103 {offsets = [0, 32], sizes = [8, 32], strides = [1, 1]} : vector<8x128xf32> to vector<8x32xf32>
    %107 = vector.extract_strided_slice %104 {offsets = [0, 64], sizes = [8, 32], strides = [1, 1]} : vector<8x128xf32> to vector<8x32xf32>
    %108 = vector.extract_strided_slice %103 {offsets = [0, 96], sizes = [8, 32], strides = [1, 1]} : vector<8x128xf32> to vector<8x32xf32>
    %109 = arith.mulf %106, %92 : vector<8x32xf32>
    %110 = arith.mulf %105, %107 : vector<8x32xf32>
    %111 = arith.addf %109, %110 : vector<8x32xf32>
    %112 = math.tanh %111 : vector<8x32xf32>
    %113 = arith.mulf %108, %112 : vector<8x32xf32>
    %c0_31 = arith.constant 0 : index
    %c0_32 = arith.constant 0 : index
    %114 = vector.load %arg2[%c0_31, %c0_32] : memref<8x2xi32, #tpu.memory_space<vmem>>, vector<8x2xi32>
    %115 = vector.extract_strided_slice %114 {offsets = [0, 0], sizes = [8, 1], strides = [1, 1]} : vector<8x2xi32> to vector<8x1xi32>
    %116 = vector.extract_strided_slice %114 {offsets = [0, 1], sizes = [8, 1], strides = [1, 1]} : vector<8x2xi32> to vector<8x1xi32>
    %cst_33 = arith.constant 0.000000e+00 : f32
    %117 = vector.broadcast %cst_33 : f32 to vector<8x128xf32>
    %c0_34 = arith.constant 0 : index
    %c0_35 = arith.constant 0 : index
    %c0_36 = arith.constant 0 : index
    %118 = vector.load %arg6[%c0_34, %c0_35, %c0_36] : memref<7x8x128xf32, #tpu.memory_space<vmem>>, vector<1x8x128xf32>
    %119 = vector.shape_cast %118 : vector<1x8x128xf32> to vector<8x128xf32>
    %120 = vector.shape_cast %117 : vector<8x128xf32> to vector<1x8x128xf32>
    tpu.vector_store %arg6[%c0_34, %c0_35, %c0_36], %120 {strides = array<i32>} : memref<7x8x128xf32, #tpu.memory_space<vmem>>, vector<1x8x128xf32>,
    %c0_i32 = arith.constant 0 : i32
    %121 = vector.broadcast %c0_i32 : i32 to vector<8x1xi32>
    %c0_i32_37 = arith.constant 0 : i32
    %122 = vector.broadcast %c0_i32_37 : i32 to vector<8x1xi32>
    %c32_i32 = arith.constant 32 : i32
    %123 = vector.broadcast %c32_i32 : i32 to vector<8x64xi32>
    %124 = arith.cmpi slt, %7, %123 : vector<8x64xi32>
    %c32_i32_38 = arith.constant 32 : i32
    %125 = vector.broadcast %c32_i32_38 : i32 to vector<8x1xi32>
    %126 = arith.addi %116, %125 : vector<8x1xi32>
    %127 = vector.shape_cast %115 : vector<8x1xi32> to vector<8x1xi32>
    %128 = vector.broadcast %127 : vector<8x1xi32> to vector<8x64xi32>
    %129 = vector.shape_cast %126 : vector<8x1xi32> to vector<8x1xi32>
    %130 = vector.broadcast %129 : vector<8x1xi32> to vector<8x64xi32>
    %131 = arith.select %124, %128, %130 : vector<8x64xi1>, vector<8x64xi32>
    %132 = arith.cmpi eq, %7, %131 : vector<8x64xi32>
    %cst_39 = arith.constant 1.000000e+00 : f32
    %cst_40 = arith.constant 0.000000e+00 : f32
    %133 = vector.broadcast %cst_39 : f32 to vector<8x64xf32>
    %134 = vector.broadcast %cst_40 : f32 to vector<8x64xf32>
    %135 = arith.select %132, %133, %134 : vector<8x64xi1>, vector<8x64xf32>
    %cst_41 = arith.constant dense<0.000000e+00> : vector<8x128xf32>
    %136 = tpu.matmul %135, %1, %cst_41 {dimension_numbers = #tpu.dot_dimension_numbers<[1], [0], [0], [1], [0, 0, 1, 1], [], []>} : vector<8x64xf32>, vector<64x128xf32>, vector<8x128xf32> -> vector<8x128xf32>
    %cst_42 = arith.constant dense<0.000000e+00> : vector<8x128xf32>
    %137 = tpu.matmul %113, %2, %cst_42 {dimension_numbers = #tpu.dot_dimension_numbers<[1], [0], [0], [1], [0, 0, 1, 1], [], []>} : vector<8x32xf32>, vector<32x128xf32>, vector<8x128xf32> -> vector<8x128xf32>
    %138 = arith.addf %136, %137 : vector<8x128xf32>
    %139 = arith.negf %138 : vector<8x128xf32>
    %140 = math.exp %139 : vector<8x128xf32>
    %cst_43 = arith.constant 1.000000e+00 : f32
    %141 = vector.broadcast %cst_43 : f32 to vector<8x128xf32>
    %142 = arith.addf %141, %140 : vector<8x128xf32>
    %143 = arith.divf %141, %142 : vector<8x128xf32>
    %144 = math.tanh %138 : vector<8x128xf32>
    %145 = vector.extract_strided_slice %143 {offsets = [0, 0], sizes = [8, 32], strides = [1, 1]} : vector<8x128xf32> to vector<8x32xf32>
    %146 = vector.extract_strided_slice %143 {offsets = [0, 32], sizes = [8, 32], strides = [1, 1]} : vector<8x128xf32> to vector<8x32xf32>
    %147 = vector.extract_strided_slice %144 {offsets = [0, 64], sizes = [8, 32], strides = [1, 1]} : vector<8x128xf32> to vector<8x32xf32>
    %148 = vector.extract_strided_slice %143 {offsets = [0, 96], sizes = [8, 32], strides = [1, 1]} : vector<8x128xf32> to vector<8x32xf32>
    %149 = arith.mulf %146, %111 : vector<8x32xf32>
    %150 = arith.mulf %145, %147 : vector<8x32xf32>
    %151 = arith.addf %149, %150 : vector<8x32xf32>
    %152 = math.tanh %151 : vector<8x32xf32>
    %153 = arith.mulf %148, %152 : vector<8x32xf32>
    %cst_44 = arith.constant dense<0.000000e+00> : vector<8x128xf32>
    %154 = tpu.matmul %153, %3, %cst_44 {dimension_numbers = #tpu.dot_dimension_numbers<[1], [0], [0], [1], [0, 0, 1, 1], [], []>} : vector<8x32xf32>, vector<32x128xf32>, vector<8x128xf32> -> vector<8x128xf32>
    %155 = arith.addf %154, %6 : vector<8x128xf32>
    %c1_45 = arith.constant 1 : index
    %c0_46 = arith.constant 0 : index
    %c0_47 = arith.constant 0 : index
    %156 = vector.load %arg6[%c1_45, %c0_46, %c0_47] : memref<7x8x128xf32, #tpu.memory_space<vmem>>, vector<1x8x128xf32>
    %157 = vector.shape_cast %156 : vector<1x8x128xf32> to vector<8x128xf32>
    %158 = vector.shape_cast %155 : vector<8x128xf32> to vector<1x8x128xf32>
    tpu.vector_store %arg6[%c1_45, %c0_46, %c0_47], %158 {strides = array<i32>} : memref<7x8x128xf32, #tpu.memory_space<vmem>>, vector<1x8x128xf32>,
    %cst_48 = arith.constant -1.000000e+30 : f32
    %159 = vector.broadcast %cst_48 : f32 to vector<8x128xf32>
    %160 = arith.select %11, %155, %159 : vector<8x128xi1>, vector<8x128xf32>
    %cst_49 = arith.constant -1.000000e+30 : f32
    %161 = vector.broadcast %cst_49 : f32 to vector<8x128xf32>
    %162 = arith.select %16, %155, %161 : vector<8x128xi1>, vector<8x128xf32>
    %cst_50 = arith.constant dense<0xFF800000> : vector<8xf32>
    %163 = vector.multi_reduction <maximumf>, %160, %cst_50 [1] : vector<8x128xf32> to vector<8xf32>
    %164 = vector.shape_cast %163 : vector<8xf32> to vector<8x1xf32>
    %cst_51 = arith.constant dense<0xFF800000> : vector<8xf32>
    %165 = vector.multi_reduction <maximumf>, %162, %cst_51 [1] : vector<8x128xf32> to vector<8xf32>
    %166 = vector.shape_cast %165 : vector<8xf32> to vector<8x1xf32>
    %167 = vector.broadcast %164 : vector<8x1xf32> to vector<8x128xf32>
    %168 = arith.cmpf oeq, %160, %167 : vector<8x128xf32>
    %169 = arith.andi %11, %168 : vector<8x128xi1>
    %cst_52 = arith.constant 1.000000e+09 : f32
    %170 = vector.broadcast %cst_52 : f32 to vector<8x128xf32>
    %171 = arith.select %169, %9, %170 : vector<8x128xi1>, vector<8x128xf32>
    %cst_53 = arith.constant dense<0x7F800000> : vector<8xf32>
    %172 = vector.multi_reduction <minimumf>, %171, %cst_53 [1] : vector<8x128xf32> to vector<8xf32>
    %173 = vector.shape_cast %172 : vector<8xf32> to vector<8x1xf32>
    %174 = vector.broadcast %166 : vector<8x1xf32> to vector<8x128xf32>
    %175 = arith.cmpf oeq, %162, %174 : vector<8x128xf32>
    %176 = arith.andi %16, %175 : vector<8x128xi1>
    %cst_54 = arith.constant 1.200000e+01 : f32
    %177 = vector.broadcast %cst_54 : f32 to vector<8x128xf32>
    %178 = arith.subf %9, %177 : vector<8x128xf32>
    %cst_55 = arith.constant 1.000000e+09 : f32
    %179 = vector.broadcast %cst_55 : f32 to vector<8x128xf32>
    %180 = arith.select %176, %178, %179 : vector<8x128xi1>, vector<8x128xf32>
    %cst_56 = arith.constant dense<0x7F800000> : vector<8xf32>
    %181 = vector.multi_reduction <minimumf>, %180, %cst_56 [1] : vector<8x128xf32> to vector<8xf32>
    %182 = vector.shape_cast %181 : vector<8xf32> to vector<8x1xf32>
    %183 = arith.fptosi %182 : vector<8x1xf32> to vector<8x1xi32>
    %184 = arith.fptosi %173 : vector<8x1xf32> to vector<8x1xi32>
    %c32_i32_57 = arith.constant 32 : i32
    %185 = vector.broadcast %c32_i32_57 : i32 to vector<8x64xi32>
    %186 = arith.cmpi slt, %7, %185 : vector<8x64xi32>
    %c32_i32_58 = arith.constant 32 : i32
    %187 = vector.broadcast %c32_i32_58 : i32 to vector<8x1xi32>
    %188 = arith.addi %122, %187 : vector<8x1xi32>
    %189 = vector.shape_cast %121 : vector<8x1xi32> to vector<8x1xi32>
    %190 = vector.broadcast %189 : vector<8x1xi32> to vector<8x64xi32>
    %191 = vector.shape_cast %188 : vector<8x1xi32> to vector<8x1xi32>
    %192 = vector.broadcast %191 : vector<8x1xi32> to vector<8x64xi32>
    %193 = arith.select %186, %190, %192 : vector<8x64xi1>, vector<8x64xi32>
    %194 = arith.cmpi eq, %7, %193 : vector<8x64xi32>
    %cst_59 = arith.constant 1.000000e+00 : f32
    %cst_60 = arith.constant 0.000000e+00 : f32
    %195 = vector.broadcast %cst_59 : f32 to vector<8x64xf32>
    %196 = vector.broadcast %cst_60 : f32 to vector<8x64xf32>
    %197 = arith.select %194, %195, %196 : vector<8x64xi1>, vector<8x64xf32>
    %cst_61 = arith.constant dense<0.000000e+00> : vector<8x128xf32>
    %198 = tpu.matmul %197, %1, %cst_61 {dimension_numbers = #tpu.dot_dimension_numbers<[1], [0], [0], [1], [0, 0, 1, 1], [], []>} : vector<8x64xf32>, vector<64x128xf32>, vector<8x128xf32> -> vector<8x128xf32>
    %cst_62 = arith.constant dense<0.000000e+00> : vector<8x128xf32>
    %199 = tpu.matmul %153, %2, %cst_62 {dimension_numbers = #tpu.dot_dimension_numbers<[1], [0], [0], [1], [0, 0, 1, 1], [], []>} : vector<8x32xf32>, vector<32x128xf32>, vector<8x128xf32> -> vector<8x128xf32>
    %200 = arith.addf %198, %199 : vector<8x128xf32>
    %201 = arith.negf %200 : vector<8x128xf32>
    %202 = math.exp %201 : vector<8x128xf32>
    %cst_63 = arith.constant 1.000000e+00 : f32
    %203 = vector.broadcast %cst_63 : f32 to vector<8x128xf32>
    %204 = arith.addf %203, %202 : vector<8x128xf32>
    %205 = arith.divf %203, %204 : vector<8x128xf32>
    %206 = math.tanh %200 : vector<8x128xf32>
    %207 = vector.extract_strided_slice %205 {offsets = [0, 0], sizes = [8, 32], strides = [1, 1]} : vector<8x128xf32> to vector<8x32xf32>
    %208 = vector.extract_strided_slice %205 {offsets = [0, 32], sizes = [8, 32], strides = [1, 1]} : vector<8x128xf32> to vector<8x32xf32>
    %209 = vector.extract_strided_slice %206 {offsets = [0, 64], sizes = [8, 32], strides = [1, 1]} : vector<8x128xf32> to vector<8x32xf32>
    %210 = vector.extract_strided_slice %205 {offsets = [0, 96], sizes = [8, 32], strides = [1, 1]} : vector<8x128xf32> to vector<8x32xf32>
    %211 = arith.mulf %208, %151 : vector<8x32xf32>
    %212 = arith.mulf %207, %209 : vector<8x32xf32>
    %213 = arith.addf %211, %212 : vector<8x32xf32>
    %214 = math.tanh %213 : vector<8x32xf32>
    %215 = arith.mulf %210, %214 : vector<8x32xf32>
    %cst_64 = arith.constant dense<0.000000e+00> : vector<8x128xf32>
    %216 = tpu.matmul %215, %3, %cst_64 {dimension_numbers = #tpu.dot_dimension_numbers<[1], [0], [0], [1], [0, 0, 1, 1], [], []>} : vector<8x32xf32>, vector<32x128xf32>, vector<8x128xf32> -> vector<8x128xf32>
    %217 = arith.addf %216, %6 : vector<8x128xf32>
    %c2_65 = arith.constant 2 : index
    %c0_66 = arith.constant 0 : index
    %c0_67 = arith.constant 0 : index
    %218 = vector.load %arg6[%c2_65, %c0_66, %c0_67] : memref<7x8x128xf32, #tpu.memory_space<vmem>>, vector<1x8x128xf32>
    %219 = vector.shape_cast %218 : vector<1x8x128xf32> to vector<8x128xf32>
    %220 = vector.shape_cast %217 : vector<8x128xf32> to vector<1x8x128xf32>
    tpu.vector_store %arg6[%c2_65, %c0_66, %c0_67], %220 {strides = array<i32>} : memref<7x8x128xf32, #tpu.memory_space<vmem>>, vector<1x8x128xf32>,
    %cst_68 = arith.constant -1.000000e+30 : f32
    %221 = vector.broadcast %cst_68 : f32 to vector<8x128xf32>
    %222 = arith.select %11, %217, %221 : vector<8x128xi1>, vector<8x128xf32>
    %cst_69 = arith.constant -1.000000e+30 : f32
    %223 = vector.broadcast %cst_69 : f32 to vector<8x128xf32>
    %224 = arith.select %16, %217, %223 : vector<8x128xi1>, vector<8x128xf32>
    %cst_70 = arith.constant dense<0xFF800000> : vector<8xf32>
    %225 = vector.multi_reduction <maximumf>, %222, %cst_70 [1] : vector<8x128xf32> to vector<8xf32>
    %226 = vector.shape_cast %225 : vector<8xf32> to vector<8x1xf32>
    %cst_71 = arith.constant dense<0xFF800000> : vector<8xf32>
    %227 = vector.multi_reduction <maximumf>, %224, %cst_71 [1] : vector<8x128xf32> to vector<8xf32>
    %228 = vector.shape_cast %227 : vector<8xf32> to vector<8x1xf32>
    %229 = vector.broadcast %226 : vector<8x1xf32> to vector<8x128xf32>
    %230 = arith.cmpf oeq, %222, %229 : vector<8x128xf32>
    %231 = arith.andi %11, %230 : vector<8x128xi1>
    %cst_72 = arith.constant 1.000000e+09 : f32
    %232 = vector.broadcast %cst_72 : f32 to vector<8x128xf32>
    %233 = arith.select %231, %9, %232 : vector<8x128xi1>, vector<8x128xf32>
    %cst_73 = arith.constant dense<0x7F800000> : vector<8xf32>
    %234 = vector.multi_reduction <minimumf>, %233, %cst_73 [1] : vector<8x128xf32> to vector<8xf32>
    %235 = vector.shape_cast %234 : vector<8xf32> to vector<8x1xf32>
    %236 = vector.broadcast %228 : vector<8x1xf32> to vector<8x128xf32>
    %237 = arith.cmpf oeq, %224, %236 : vector<8x128xf32>
    %238 = arith.andi %16, %237 : vector<8x128xi1>
    %cst_74 = arith.constant 1.200000e+01 : f32
    %239 = vector.broadcast %cst_74 : f32 to vector<8x128xf32>
    %240 = arith.subf %9, %239 : vector<8x128xf32>
    %cst_75 = arith.constant 1.000000e+09 : f32
    %241 = vector.broadcast %cst_75 : f32 to vector<8x128xf32>
    %242 = arith.select %238, %240, %241 : vector<8x128xi1>, vector<8x128xf32>
    %cst_76 = arith.constant dense<0x7F800000> : vector<8xf32>
    %243 = vector.multi_reduction <minimumf>, %242, %cst_76 [1] : vector<8x128xf32> to vector<8xf32>
    %244 = vector.shape_cast %243 : vector<8xf32> to vector<8x1xf32>
    %245 = arith.fptosi %244 : vector<8x1xf32> to vector<8x1xi32>
    %246 = arith.fptosi %235 : vector<8x1xf32> to vector<8x1xi32>
    %c32_i32_77 = arith.constant 32 : i32
    %247 = vector.broadcast %c32_i32_77 : i32 to vector<8x64xi32>
    %248 = arith.cmpi slt, %7, %247 : vector<8x64xi32>
    %c32_i32_78 = arith.constant 32 : i32
    %249 = vector.broadcast %c32_i32_78 : i32 to vector<8x1xi32>
    %250 = arith.addi %184, %249 : vector<8x1xi32>
    %251 = vector.shape_cast %183 : vector<8x1xi32> to vector<8x1xi32>
    %252 = vector.broadcast %251 : vector<8x1xi32> to vector<8x64xi32>
    %253 = vector.shape_cast %250 : vector<8x1xi32> to vector<8x1xi32>
    %254 = vector.broadcast %253 : vector<8x1xi32> to vector<8x64xi32>
    %255 = arith.select %248, %252, %254 : vector<8x64xi1>, vector<8x64xi32>
    %256 = arith.cmpi eq, %7, %255 : vector<8x64xi32>
    %cst_79 = arith.constant 1.000000e+00 : f32
    %cst_80 = arith.constant 0.000000e+00 : f32
    %257 = vector.broadcast %cst_79 : f32 to vector<8x64xf32>
    %258 = vector.broadcast %cst_80 : f32 to vector<8x64xf32>
    %259 = arith.select %256, %257, %258 : vector<8x64xi1>, vector<8x64xf32>
    %cst_81 = arith.constant dense<0.000000e+00> : vector<8x128xf32>
    %260 = tpu.matmul %259, %1, %cst_81 {dimension_numbers = #tpu.dot_dimension_numbers<[1], [0], [0], [1], [0, 0, 1, 1], [], []>} : vector<8x64xf32>, vector<64x128xf32>, vector<8x128xf32> -> vector<8x128xf32>
    %cst_82 = arith.constant dense<0.000000e+00> : vector<8x128xf32>
    %261 = tpu.matmul %215, %2, %cst_82 {dimension_numbers = #tpu.dot_dimension_numbers<[1], [0], [0], [1], [0, 0, 1, 1], [], []>} : vector<8x32xf32>, vector<32x128xf32>, vector<8x128xf32> -> vector<8x128xf32>
    %262 = arith.addf %260, %261 : vector<8x128xf32>
    %263 = arith.negf %262 : vector<8x128xf32>
    %264 = math.exp %263 : vector<8x128xf32>
    %cst_83 = arith.constant 1.000000e+00 : f32
    %265 = vector.broadcast %cst_83 : f32 to vector<8x128xf32>
    %266 = arith.addf %265, %264 : vector<8x128xf32>
    %267 = arith.divf %265, %266 : vector<8x128xf32>
    %268 = math.tanh %262 : vector<8x128xf32>
    %269 = vector.extract_strided_slice %267 {offsets = [0, 0], sizes = [8, 32], strides = [1, 1]} : vector<8x128xf32> to vector<8x32xf32>
    %270 = vector.extract_strided_slice %267 {offsets = [0, 32], sizes = [8, 32], strides = [1, 1]} : vector<8x128xf32> to vector<8x32xf32>
    %271 = vector.extract_strided_slice %268 {offsets = [0, 64], sizes = [8, 32], strides = [1, 1]} : vector<8x128xf32> to vector<8x32xf32>
    %272 = vector.extract_strided_slice %267 {offsets = [0, 96], sizes = [8, 32], strides = [1, 1]} : vector<8x128xf32> to vector<8x32xf32>
    %273 = arith.mulf %270, %213 : vector<8x32xf32>
    %274 = arith.mulf %269, %271 : vector<8x32xf32>
    %275 = arith.addf %273, %274 : vector<8x32xf32>
    %276 = math.tanh %275 : vector<8x32xf32>
    %277 = arith.mulf %272, %276 : vector<8x32xf32>
    %cst_84 = arith.constant dense<0.000000e+00> : vector<8x128xf32>
    %278 = tpu.matmul %277, %3, %cst_84 {dimension_numbers = #tpu.dot_dimension_numbers<[1], [0], [0], [1], [0, 0, 1, 1], [], []>} : vector<8x32xf32>, vector<32x128xf32>, vector<8x128xf32> -> vector<8x128xf32>
    %279 = arith.addf %278, %6 : vector<8x128xf32>
    %c3_85 = arith.constant 3 : index
    %c0_86 = arith.constant 0 : index
    %c0_87 = arith.constant 0 : index
    %280 = vector.load %arg6[%c3_85, %c0_86, %c0_87] : memref<7x8x128xf32, #tpu.memory_space<vmem>>, vector<1x8x128xf32>
    %281 = vector.shape_cast %280 : vector<1x8x128xf32> to vector<8x128xf32>
    %282 = vector.shape_cast %279 : vector<8x128xf32> to vector<1x8x128xf32>
    tpu.vector_store %arg6[%c3_85, %c0_86, %c0_87], %282 {strides = array<i32>} : memref<7x8x128xf32, #tpu.memory_space<vmem>>, vector<1x8x128xf32>,
    %cst_88 = arith.constant -1.000000e+30 : f32
    %283 = vector.broadcast %cst_88 : f32 to vector<8x128xf32>
    %284 = arith.select %11, %279, %283 : vector<8x128xi1>, vector<8x128xf32>
    %cst_89 = arith.constant -1.000000e+30 : f32
    %285 = vector.broadcast %cst_89 : f32 to vector<8x128xf32>
    %286 = arith.select %16, %279, %285 : vector<8x128xi1>, vector<8x128xf32>
    %cst_90 = arith.constant dense<0xFF800000> : vector<8xf32>
    %287 = vector.multi_reduction <maximumf>, %284, %cst_90 [1] : vector<8x128xf32> to vector<8xf32>
    %288 = vector.shape_cast %287 : vector<8xf32> to vector<8x1xf32>
    %cst_91 = arith.constant dense<0xFF800000> : vector<8xf32>
    %289 = vector.multi_reduction <maximumf>, %286, %cst_91 [1] : vector<8x128xf32> to vector<8xf32>
    %290 = vector.shape_cast %289 : vector<8xf32> to vector<8x1xf32>
    %291 = vector.broadcast %288 : vector<8x1xf32> to vector<8x128xf32>
    %292 = arith.cmpf oeq, %284, %291 : vector<8x128xf32>
    %293 = arith.andi %11, %292 : vector<8x128xi1>
    %cst_92 = arith.constant 1.000000e+09 : f32
    %294 = vector.broadcast %cst_92 : f32 to vector<8x128xf32>
    %295 = arith.select %293, %9, %294 : vector<8x128xi1>, vector<8x128xf32>
    %cst_93 = arith.constant dense<0x7F800000> : vector<8xf32>
    %296 = vector.multi_reduction <minimumf>, %295, %cst_93 [1] : vector<8x128xf32> to vector<8xf32>
    %297 = vector.shape_cast %296 : vector<8xf32> to vector<8x1xf32>
    %298 = vector.broadcast %290 : vector<8x1xf32> to vector<8x128xf32>
    %299 = arith.cmpf oeq, %286, %298 : vector<8x128xf32>
    %300 = arith.andi %16, %299 : vector<8x128xi1>
    %cst_94 = arith.constant 1.200000e+01 : f32
    %301 = vector.broadcast %cst_94 : f32 to vector<8x128xf32>
    %302 = arith.subf %9, %301 : vector<8x128xf32>
    %cst_95 = arith.constant 1.000000e+09 : f32
    %303 = vector.broadcast %cst_95 : f32 to vector<8x128xf32>
    %304 = arith.select %300, %302, %303 : vector<8x128xi1>, vector<8x128xf32>
    %cst_96 = arith.constant dense<0x7F800000> : vector<8xf32>
    %305 = vector.multi_reduction <minimumf>, %304, %cst_96 [1] : vector<8x128xf32> to vector<8xf32>
    %306 = vector.shape_cast %305 : vector<8xf32> to vector<8x1xf32>
    %307 = arith.fptosi %306 : vector<8x1xf32> to vector<8x1xi32>
    %308 = arith.fptosi %297 : vector<8x1xf32> to vector<8x1xi32>
    %c32_i32_97 = arith.constant 32 : i32
    %309 = vector.broadcast %c32_i32_97 : i32 to vector<8x64xi32>
    %310 = arith.cmpi slt, %7, %309 : vector<8x64xi32>
    %c32_i32_98 = arith.constant 32 : i32
    %311 = vector.broadcast %c32_i32_98 : i32 to vector<8x1xi32>
    %312 = arith.addi %246, %311 : vector<8x1xi32>
    %313 = vector.shape_cast %245 : vector<8x1xi32> to vector<8x1xi32>
    %314 = vector.broadcast %313 : vector<8x1xi32> to vector<8x64xi32>
    %315 = vector.shape_cast %312 : vector<8x1xi32> to vector<8x1xi32>
    %316 = vector.broadcast %315 : vector<8x1xi32> to vector<8x64xi32>
    %317 = arith.select %310, %314, %316 : vector<8x64xi1>, vector<8x64xi32>
    %318 = arith.cmpi eq, %7, %317 : vector<8x64xi32>
    %cst_99 = arith.constant 1.000000e+00 : f32
    %cst_100 = arith.constant 0.000000e+00 : f32
    %319 = vector.broadcast %cst_99 : f32 to vector<8x64xf32>
    %320 = vector.broadcast %cst_100 : f32 to vector<8x64xf32>
    %321 = arith.select %318, %319, %320 : vector<8x64xi1>, vector<8x64xf32>
    %cst_101 = arith.constant dense<0.000000e+00> : vector<8x128xf32>
    %322 = tpu.matmul %321, %1, %cst_101 {dimension_numbers = #tpu.dot_dimension_numbers<[1], [0], [0], [1], [0, 0, 1, 1], [], []>} : vector<8x64xf32>, vector<64x128xf32>, vector<8x128xf32> -> vector<8x128xf32>
    %cst_102 = arith.constant dense<0.000000e+00> : vector<8x128xf32>
    %323 = tpu.matmul %277, %2, %cst_102 {dimension_numbers = #tpu.dot_dimension_numbers<[1], [0], [0], [1], [0, 0, 1, 1], [], []>} : vector<8x32xf32>, vector<32x128xf32>, vector<8x128xf32> -> vector<8x128xf32>
    %324 = arith.addf %322, %323 : vector<8x128xf32>
    %325 = arith.negf %324 : vector<8x128xf32>
    %326 = math.exp %325 : vector<8x128xf32>
    %cst_103 = arith.constant 1.000000e+00 : f32
    %327 = vector.broadcast %cst_103 : f32 to vector<8x128xf32>
    %328 = arith.addf %327, %326 : vector<8x128xf32>
    %329 = arith.divf %327, %328 : vector<8x128xf32>
    %330 = math.tanh %324 : vector<8x128xf32>
    %331 = vector.extract_strided_slice %329 {offsets = [0, 0], sizes = [8, 32], strides = [1, 1]} : vector<8x128xf32> to vector<8x32xf32>
    %332 = vector.extract_strided_slice %329 {offsets = [0, 32], sizes = [8, 32], strides = [1, 1]} : vector<8x128xf32> to vector<8x32xf32>
    %333 = vector.extract_strided_slice %330 {offsets = [0, 64], sizes = [8, 32], strides = [1, 1]} : vector<8x128xf32> to vector<8x32xf32>
    %334 = vector.extract_strided_slice %329 {offsets = [0, 96], sizes = [8, 32], strides = [1, 1]} : vector<8x128xf32> to vector<8x32xf32>
    %335 = arith.mulf %332, %275 : vector<8x32xf32>
    %336 = arith.mulf %331, %333 : vector<8x32xf32>
    %337 = arith.addf %335, %336 : vector<8x32xf32>
    %338 = math.tanh %337 : vector<8x32xf32>
    %339 = arith.mulf %334, %338 : vector<8x32xf32>
    %cst_104 = arith.constant dense<0.000000e+00> : vector<8x128xf32>
    %340 = tpu.matmul %339, %3, %cst_104 {dimension_numbers = #tpu.dot_dimension_numbers<[1], [0], [0], [1], [0, 0, 1, 1], [], []>} : vector<8x32xf32>, vector<32x128xf32>, vector<8x128xf32> -> vector<8x128xf32>
    %341 = arith.addf %340, %6 : vector<8x128xf32>
    %c4_105 = arith.constant 4 : index
    %c0_106 = arith.constant 0 : index
    %c0_107 = arith.constant 0 : index
    %342 = vector.load %arg6[%c4_105, %c0_106, %c0_107] : memref<7x8x128xf32, #tpu.memory_space<vmem>>, vector<1x8x128xf32>
    %343 = vector.shape_cast %342 : vector<1x8x128xf32> to vector<8x128xf32>
    %344 = vector.shape_cast %341 : vector<8x128xf32> to vector<1x8x128xf32>
    tpu.vector_store %arg6[%c4_105, %c0_106, %c0_107], %344 {strides = array<i32>} : memref<7x8x128xf32, #tpu.memory_space<vmem>>, vector<1x8x128xf32>,
    %cst_108 = arith.constant -1.000000e+30 : f32
    %345 = vector.broadcast %cst_108 : f32 to vector<8x128xf32>
    %346 = arith.select %11, %341, %345 : vector<8x128xi1>, vector<8x128xf32>
    %cst_109 = arith.constant -1.000000e+30 : f32
    %347 = vector.broadcast %cst_109 : f32 to vector<8x128xf32>
    %348 = arith.select %16, %341, %347 : vector<8x128xi1>, vector<8x128xf32>
    %cst_110 = arith.constant dense<0xFF800000> : vector<8xf32>
    %349 = vector.multi_reduction <maximumf>, %346, %cst_110 [1] : vector<8x128xf32> to vector<8xf32>
    %350 = vector.shape_cast %349 : vector<8xf32> to vector<8x1xf32>
    %cst_111 = arith.constant dense<0xFF800000> : vector<8xf32>
    %351 = vector.multi_reduction <maximumf>, %348, %cst_111 [1] : vector<8x128xf32> to vector<8xf32>
    %352 = vector.shape_cast %351 : vector<8xf32> to vector<8x1xf32>
    %353 = vector.broadcast %350 : vector<8x1xf32> to vector<8x128xf32>
    %354 = arith.cmpf oeq, %346, %353 : vector<8x128xf32>
    %355 = arith.andi %11, %354 : vector<8x128xi1>
    %cst_112 = arith.constant 1.000000e+09 : f32
    %356 = vector.broadcast %cst_112 : f32 to vector<8x128xf32>
    %357 = arith.select %355, %9, %356 : vector<8x128xi1>, vector<8x128xf32>
    %cst_113 = arith.constant dense<0x7F800000> : vector<8xf32>
    %358 = vector.multi_reduction <minimumf>, %357, %cst_113 [1] : vector<8x128xf32> to vector<8xf32>
    %359 = vector.shape_cast %358 : vector<8xf32> to vector<8x1xf32>
    %360 = vector.broadcast %352 : vector<8x1xf32> to vector<8x128xf32>
    %361 = arith.cmpf oeq, %348, %360 : vector<8x128xf32>
    %362 = arith.andi %16, %361 : vector<8x128xi1>
    %cst_114 = arith.constant 1.200000e+01 : f32
    %363 = vector.broadcast %cst_114 : f32 to vector<8x128xf32>
    %364 = arith.subf %9, %363 : vector<8x128xf32>
    %cst_115 = arith.constant 1.000000e+09 : f32
    %365 = vector.broadcast %cst_115 : f32 to vector<8x128xf32>
    %366 = arith.select %362, %364, %365 : vector<8x128xi1>, vector<8x128xf32>
    %cst_116 = arith.constant dense<0x7F800000> : vector<8xf32>
    %367 = vector.multi_reduction <minimumf>, %366, %cst_116 [1] : vector<8x128xf32> to vector<8xf32>
    %368 = vector.shape_cast %367 : vector<8xf32> to vector<8x1xf32>
    %369 = arith.fptosi %368 : vector<8x1xf32> to vector<8x1xi32>
    %370 = arith.fptosi %359 : vector<8x1xf32> to vector<8x1xi32>
    %c32_i32_117 = arith.constant 32 : i32
    %371 = vector.broadcast %c32_i32_117 : i32 to vector<8x64xi32>
    %372 = arith.cmpi slt, %7, %371 : vector<8x64xi32>
    %c32_i32_118 = arith.constant 32 : i32
    %373 = vector.broadcast %c32_i32_118 : i32 to vector<8x1xi32>
    %374 = arith.addi %308, %373 : vector<8x1xi32>
    %375 = vector.shape_cast %307 : vector<8x1xi32> to vector<8x1xi32>
    %376 = vector.broadcast %375 : vector<8x1xi32> to vector<8x64xi32>
    %377 = vector.shape_cast %374 : vector<8x1xi32> to vector<8x1xi32>
    %378 = vector.broadcast %377 : vector<8x1xi32> to vector<8x64xi32>
    %379 = arith.select %372, %376, %378 : vector<8x64xi1>, vector<8x64xi32>
    %380 = arith.cmpi eq, %7, %379 : vector<8x64xi32>
    %cst_119 = arith.constant 1.000000e+00 : f32
    %cst_120 = arith.constant 0.000000e+00 : f32
    %381 = vector.broadcast %cst_119 : f32 to vector<8x64xf32>
    %382 = vector.broadcast %cst_120 : f32 to vector<8x64xf32>
    %383 = arith.select %380, %381, %382 : vector<8x64xi1>, vector<8x64xf32>
    %cst_121 = arith.constant dense<0.000000e+00> : vector<8x128xf32>
    %384 = tpu.matmul %383, %1, %cst_121 {dimension_numbers = #tpu.dot_dimension_numbers<[1], [0], [0], [1], [0, 0, 1, 1], [], []>} : vector<8x64xf32>, vector<64x128xf32>, vector<8x128xf32> -> vector<8x128xf32>
    %cst_122 = arith.constant dense<0.000000e+00> : vector<8x128xf32>
    %385 = tpu.matmul %339, %2, %cst_122 {dimension_numbers = #tpu.dot_dimension_numbers<[1], [0], [0], [1], [0, 0, 1, 1], [], []>} : vector<8x32xf32>, vector<32x128xf32>, vector<8x128xf32> -> vector<8x128xf32>
    %386 = arith.addf %384, %385 : vector<8x128xf32>
    %387 = arith.negf %386 : vector<8x128xf32>
    %388 = math.exp %387 : vector<8x128xf32>
    %cst_123 = arith.constant 1.000000e+00 : f32
    %389 = vector.broadcast %cst_123 : f32 to vector<8x128xf32>
    %390 = arith.addf %389, %388 : vector<8x128xf32>
    %391 = arith.divf %389, %390 : vector<8x128xf32>
    %392 = math.tanh %386 : vector<8x128xf32>
    %393 = vector.extract_strided_slice %391 {offsets = [0, 0], sizes = [8, 32], strides = [1, 1]} : vector<8x128xf32> to vector<8x32xf32>
    %394 = vector.extract_strided_slice %391 {offsets = [0, 32], sizes = [8, 32], strides = [1, 1]} : vector<8x128xf32> to vector<8x32xf32>
    %395 = vector.extract_strided_slice %392 {offsets = [0, 64], sizes = [8, 32], strides = [1, 1]} : vector<8x128xf32> to vector<8x32xf32>
    %396 = vector.extract_strided_slice %391 {offsets = [0, 96], sizes = [8, 32], strides = [1, 1]} : vector<8x128xf32> to vector<8x32xf32>
    %397 = arith.mulf %394, %337 : vector<8x32xf32>
    %398 = arith.mulf %393, %395 : vector<8x32xf32>
    %399 = arith.addf %397, %398 : vector<8x32xf32>
    %400 = math.tanh %399 : vector<8x32xf32>
    %401 = arith.mulf %396, %400 : vector<8x32xf32>
    %cst_124 = arith.constant dense<0.000000e+00> : vector<8x128xf32>
    %402 = tpu.matmul %401, %3, %cst_124 {dimension_numbers = #tpu.dot_dimension_numbers<[1], [0], [0], [1], [0, 0, 1, 1], [], []>} : vector<8x32xf32>, vector<32x128xf32>, vector<8x128xf32> -> vector<8x128xf32>
    %403 = arith.addf %402, %6 : vector<8x128xf32>
    %c5 = arith.constant 5 : index
    %c0_125 = arith.constant 0 : index
    %c0_126 = arith.constant 0 : index
    %404 = vector.load %arg6[%c5, %c0_125, %c0_126] : memref<7x8x128xf32, #tpu.memory_space<vmem>>, vector<1x8x128xf32>
    %405 = vector.shape_cast %404 : vector<1x8x128xf32> to vector<8x128xf32>
    %406 = vector.shape_cast %403 : vector<8x128xf32> to vector<1x8x128xf32>
    tpu.vector_store %arg6[%c5, %c0_125, %c0_126], %406 {strides = array<i32>} : memref<7x8x128xf32, #tpu.memory_space<vmem>>, vector<1x8x128xf32>,
    %c32_i32_127 = arith.constant 32 : i32
    %407 = vector.broadcast %c32_i32_127 : i32 to vector<8x64xi32>
    %408 = arith.cmpi slt, %7, %407 : vector<8x64xi32>
    %c32_i32_128 = arith.constant 32 : i32
    %409 = vector.broadcast %c32_i32_128 : i32 to vector<8x1xi32>
    %410 = arith.addi %370, %409 : vector<8x1xi32>
    %411 = vector.shape_cast %369 : vector<8x1xi32> to vector<8x1xi32>
    %412 = vector.broadcast %411 : vector<8x1xi32> to vector<8x64xi32>
    %413 = vector.shape_cast %410 : vector<8x1xi32> to vector<8x1xi32>
    %414 = vector.broadcast %413 : vector<8x1xi32> to vector<8x64xi32>
    %415 = arith.select %408, %412, %414 : vector<8x64xi1>, vector<8x64xi32>
    %416 = arith.cmpi eq, %7, %415 : vector<8x64xi32>
    %cst_129 = arith.constant 1.000000e+00 : f32
    %cst_130 = arith.constant 0.000000e+00 : f32
    %417 = vector.broadcast %cst_129 : f32 to vector<8x64xf32>
    %418 = vector.broadcast %cst_130 : f32 to vector<8x64xf32>
    %419 = arith.select %416, %417, %418 : vector<8x64xi1>, vector<8x64xf32>
    %cst_131 = arith.constant dense<0.000000e+00> : vector<8x128xf32>
    %420 = tpu.matmul %419, %1, %cst_131 {dimension_numbers = #tpu.dot_dimension_numbers<[1], [0], [0], [1], [0, 0, 1, 1], [], []>} : vector<8x64xf32>, vector<64x128xf32>, vector<8x128xf32> -> vector<8x128xf32>
    %cst_132 = arith.constant dense<0.000000e+00> : vector<8x128xf32>
    %421 = tpu.matmul %401, %2, %cst_132 {dimension_numbers = #tpu.dot_dimension_numbers<[1], [0], [0], [1], [0, 0, 1, 1], [], []>} : vector<8x32xf32>, vector<32x128xf32>, vector<8x128xf32> -> vector<8x128xf32>
    %422 = arith.addf %420, %421 : vector<8x128xf32>
    %423 = arith.negf %422 : vector<8x128xf32>
    %424 = math.exp %423 : vector<8x128xf32>
    %cst_133 = arith.constant 1.000000e+00 : f32
    %425 = vector.broadcast %cst_133 : f32 to vector<8x128xf32>
    %426 = arith.addf %425, %424 : vector<8x128xf32>
    %427 = arith.divf %425, %426 : vector<8x128xf32>
    %428 = math.tanh %422 : vector<8x128xf32>
    %429 = vector.extract_strided_slice %427 {offsets = [0, 0], sizes = [8, 32], strides = [1, 1]} : vector<8x128xf32> to vector<8x32xf32>
    %430 = vector.extract_strided_slice %427 {offsets = [0, 32], sizes = [8, 32], strides = [1, 1]} : vector<8x128xf32> to vector<8x32xf32>
    %431 = vector.extract_strided_slice %428 {offsets = [0, 64], sizes = [8, 32], strides = [1, 1]} : vector<8x128xf32> to vector<8x32xf32>
    %432 = vector.extract_strided_slice %427 {offsets = [0, 96], sizes = [8, 32], strides = [1, 1]} : vector<8x128xf32> to vector<8x32xf32>
    %433 = arith.mulf %430, %399 : vector<8x32xf32>
    %434 = arith.mulf %429, %431 : vector<8x32xf32>
    %435 = arith.addf %433, %434 : vector<8x32xf32>
    %436 = math.tanh %435 : vector<8x32xf32>
    %437 = arith.mulf %432, %436 : vector<8x32xf32>
    %cst_134 = arith.constant dense<0.000000e+00> : vector<8x128xf32>
    %438 = tpu.matmul %437, %3, %cst_134 {dimension_numbers = #tpu.dot_dimension_numbers<[1], [0], [0], [1], [0, 0, 1, 1], [], []>} : vector<8x32xf32>, vector<32x128xf32>, vector<8x128xf32> -> vector<8x128xf32>
    %439 = arith.addf %438, %6 : vector<8x128xf32>
    %c6 = arith.constant 6 : index
    %c0_135 = arith.constant 0 : index
    %c0_136 = arith.constant 0 : index
    %440 = vector.load %arg6[%c6, %c0_135, %c0_136] : memref<7x8x128xf32, #tpu.memory_space<vmem>>, vector<1x8x128xf32>
    %441 = vector.shape_cast %440 : vector<1x8x128xf32> to vector<8x128xf32>
    %442 = vector.shape_cast %439 : vector<8x128xf32> to vector<1x8x128xf32>
    tpu.vector_store %arg6[%c6, %c0_135, %c0_136], %442 {strides = array<i32>} : memref<7x8x128xf32, #tpu.memory_space<vmem>>, vector<1x8x128xf32>,
    return
  }
}

</mosaic_0001>

<llo_original>
// kernel: encoder_decoder_forward.1
$region0: #{encoder_decoder_forward.1}
  #allocation0 [shape = 'u32[]', space=smem, size = 0x4, offset = 0x4, fixed_abs, tag = 'smem constant byte address 0x4 - core index']
  #allocation1 [shape = 'u32[72,128]{1,0:T(1,128)}', space=vmem, size = 0x9000, scoped, tag = 'internal scratch']
  %s0 = inlined_call_operand.vmem [shape: f32[5,8,128], index: 0, kind: input, shape index: {}]
  %s1 = inlined_call_operand.vmem [shape: f32[32,128], index: 1, kind: input, shape index: {}]
  %s2 = inlined_call_operand.vmem [shape: s32[8,2], index: 2, kind: input, shape index: {}]
  %s3 = inlined_call_operand.vmem [shape: f32[96,128], index: 3, kind: input, shape index: {}]
  %s4 = inlined_call_operand.vmem [shape: f32[32,128], index: 4, kind: input, shape index: {}]
  %s5 = inlined_call_operand.vmem [shape: f32[1,128], index: 5, kind: input, shape index: {}]
  %s6 = inlined_call_operand.vmem [shape: f32[7,8,128], index: 6, kind: output, shape index: {}]
  %s7 = sld [smem:[#allocation0]]
  $region34: #{encoder_decoder_forward.1} parent=0
    _
  %s9 = ssub.s32 1, %s7
  %s10 = scalar_select 0, %s9, %s7
  // Predicated region
  $region2: #{encoder_decoder_forward.1} parent=0 // pred_check
    _
  $region3: #{encoder_decoder_forward.1} parent=0 // pred_check_branch
    %12 = sbr.rel (0) target = $region5
  $region4: #{encoder_decoder_forward.1} parent=0 // pred_region
    _
  $region5: #{encoder_decoder_forward.1} parent=0 // pred_fallthru
    _
  // Predicated region
  $region6: #{encoder_decoder_forward.1} parent=0 // pred_check
    _
  $region7: #{encoder_decoder_forward.1} parent=0 // pred_check_branch
    %14 = sbr.rel (0) target = $region9
  $region8: #{encoder_decoder_forward.1} parent=0 // pred_region
    _
  $region9: #{encoder_decoder_forward.1} parent=0 // pred_fallthru
    _
  // Predicated region
  $region10: #{encoder_decoder_forward.1} parent=0 // pred_check
    _
  $region11: #{encoder_decoder_forward.1} parent=0 // pred_check_branch
    %16 = sbr.rel (0) target = $region13
  $region12: #{encoder_decoder_forward.1} parent=0 // pred_region
    _
  $region13: #{encoder_decoder_forward.1} parent=0 // pred_fallthru
    _
  // Predicated region
  $region14: #{encoder_decoder_forward.1} parent=0 // pred_check
    _
  $region15: #{encoder_decoder_forward.1} parent=0 // pred_check_branch
    %18 = sbr.rel (0) target = $region17
  $region16: #{encoder_decoder_forward.1} parent=0 // pred_region
    _
  $region17: #{encoder_decoder_forward.1} parent=0 // pred_fallthru
    _
  // Predicated region
  $region18: #{encoder_decoder_forward.1} parent=0 // pred_check
    _
  $region19: #{encoder_decoder_forward.1} parent=0 // pred_check_branch
    %20 = sbr.rel (0) target = $region21
  $region20: #{encoder_decoder_forward.1} parent=0 // pred_region
    _
  $region21: #{encoder_decoder_forward.1} parent=0 // pred_fallthru
    _
  // Predicated region
  $region22: #{encoder_decoder_forward.1} parent=0 // pred_check
    _
  $region23: #{encoder_decoder_forward.1} parent=0 // pred_check_branch
    %22 = sbr.rel (0) target = $region25
  $region24: #{encoder_decoder_forward.1} parent=0 // pred_region
    _
  $region25: #{encoder_decoder_forward.1} parent=0 // pred_fallthru
    _
  %v23 = vld [vmem:[%s1] sm:$0xff]
  %v24 = vld [vmem:[%s1 + $0x8] sm:$0xff]
  %v25 = vld [vmem:[%s1 + $0x10] sm:$0xff]
  %v26 = vld [vmem:[%s1 + $0x18] sm:$0xff]
  %v27 = vld [vmem:[%s3] sm:$0xff]
  %v28 = vld [vmem:[%s3 + $0x8] sm:$0xff]
  %v29 = vld [vmem:[%s3 + $0x10] sm:$0xff]
  %v30 = vld [vmem:[%s3 + $0x18] sm:$0xff]
  %v31 = vld [vmem:[%s3 + $0x20] sm:$0xff]
  %v32 = vld [vmem:[%s3 + $0x28] sm:$0xff]
  %v33 = vld [vmem:[%s3 + $0x30] sm:$0xff]
  %v34 = vld [vmem:[%s3 + $0x38] sm:$0xff]
  %v35 = vld [vmem:[%s3 + $0x40] sm:$0xff]
  %v36 = vld [vmem:[%s3 + $0x48] sm:$0xff]
  %v37 = vld [vmem:[%s3 + $0x50] sm:$0xff]
  %v38 = vld [vmem:[%s3 + $0x58] sm:$0xff]
  %v39 = vld [vmem:[%s4] sm:$0xff]
  %v40 = vld [vmem:[%s4 + $0x8] sm:$0xff]
  %v41 = vld [vmem:[%s4 + $0x10] sm:$0xff]
  %v42 = vld [vmem:[%s4 + $0x18] sm:$0xff]
  %v43 = vld [vmem:[%s5] sm:$0x1]
  %v45 = vperm.slane %v43, 0
  %v47 = vlaneseq
  %v48 = vand.u32 %v47, 127
  %v49 = vcvt.s32.f32 %v48
  %vm50 = vcmp.lt.s32.totalorder %v48, 12
  %vm51 = vcmp.ge.s32.totalorder %v48, 12
  %vm52 = vcmp.lt.s32.totalorder %v48, 22
  %vm53 = vmand %vm51, %vm52
  %v54 = vld [vmem:[%s0] sm:$0xff]
  %vm55 = vcmask 261120
  %v57 = vsel %vm55, 0.0, 0
  %59 = vmatpush.msra.mxu0 0.0
  %60 = vmatpush.msra.mxu0 0.0
  %61 = vmatpush.msra.mxu0 0.0
  %62 = vmatpush.msra.mxu0 0.0
  %63 = vmatpush.msra.mxu0 0.0
  %64 = vmatpush.msra.mxu0 0.0
  %65 = vmatpush.msra.mxu0 0.0
  %66 = vmatpush.msra.mxu0 0.0
  %67 = vmatpush.msra.mxu0 0.0
  %68 = vmatpush.msra.mxu0 0.0
  %69 = vmatpush.msra.mxu0 0.0
  %70 = vmatpush.msra.mxu0 0.0
  %71 = vmatpush.msra.mxu0 %v26
  %72 = vmatpush.msra.mxu0 %v25
  %73 = vmatpush.msra.mxu0 %v24
  %74 = vmatpush.msra.mxu0 %v23
  %75 = vmatmul.f32.gmra.mxu0 %v57
  %v76 = vpop.f32.mrf.mxu0
  %v77 = vadd.f32 0.0, %v76
  %78 = vdwg.mxu0
  %v79 = vadd.f32 %v54, %v77
  %v80 = vxor.u32 %v79, 2147483648
  %v81 = vmul.f32 %v80, 1.442695
  %v82 = vpow.pop %v81
  %v83 = vadd.f32 %v82, 1.0
  %v84 = vrcp.pop %v83
  %v85 = vmul.f32 %v83, %v84
  %v86 = vsub.f32 1.0, %v85
  %v87 = vmul.f32 %v84, %v86
  %v88 = vadd.f32 %v84, %v87
  %vm89 = vweird.f32 %v83
  %vm90 = vweird.f32 %v84
  %vm91 = vmor %vm89, %vm90
  %v92 = vsel %vm91, %v84, %v88
  %v93 = vand.u32 2147483647, %v83
  %vm94 = vcmp.eq.f32.partialorder %v93, 8.507059e+37
  %v95 = vand.u32 %v83, 2147483648
  %v96 = vor.u32 1.1754944e-38, %v95
  %v97 = vsel %vm94, %v96, %v92
  %v98 = vmul.f32 1.0, %v97
  %v99 = vtanh.pop %v79
  %v100 = vmul.f32 %v98, 0.0
  %102 = vrot.lane.b32.xlu0 %v99, 64
  %v103 = vpop.permute.xlu0 %102
  %v105 = vmul.f32 %v98, %v103
  %107 = vrot.lane.b32.xlu0 %v105, 32
  %v108 = vpop.permute.xlu0 %107
  %v110 = vadd.f32 %v100, %v108
  %v111 = vtanh.pop %v110
  %113 = vrot.lane.b32.xlu0 %v111, 64
  %v114 = vpop.permute.xlu0 %113
  %v116 = vmul.f32 %v98, %v114
  %s117 = scalar_lea.vmem %s0, 8
  %v118 = vld [vmem:[%s117] sm:$0xff]
  %120 = vrot.lane.b32.xlu0 %v116, 32
  %v121 = vpop.permute.xlu0 %120
  %v122 = vsel %vm55, %v121, 0
  %124 = vmatpush.msra.mxu0 0.0
  %125 = vmatpush.msra.mxu0 0.0
  %126 = vmatpush.msra.mxu0 0.0
  %127 = vmatpush.msra.mxu0 0.0
  %128 = vmatpush.msra.mxu0 0.0
  %129 = vmatpush.msra.mxu0 0.0
  %130 = vmatpush.msra.mxu0 0.0
  %131 = vmatpush.msra.mxu0 0.0
  %132 = vmatpush.msra.mxu0 0.0
  %133 = vmatpush.msra.mxu0 0.0
  %134 = vmatpush.msra.mxu0 0.0
  %135 = vmatpush.msra.mxu0 0.0
  %136 = vmatpush.msra.mxu0 %v26
  %137 = vmatpush.msra.mxu0 %v25
  %138 = vmatpush.msra.mxu0 %v24
  %139 = vmatpush.msra.mxu0 %v23
  %140 = vmatmul.f32.gmra.mxu0 %v122
  %v141 = vpop.f32.mrf.mxu0
  %v142 = vadd.f32 0.0, %v141
  %143 = vdwg.mxu0
  %v144 = vadd.f32 %v118, %v142
  %v145 = vxor.u32 %v144, 2147483648
  %v146 = vmul.f32 %v145, 1.442695
  %v147 = vpow.pop %v146
  %v148 = vadd.f32 %v147, 1.0
  %v149 = vrcp.pop %v148
  %v150 = vmul.f32 %v148, %v149
  %v151 = vsub.f32 1.0, %v150
  %v152 = vmul.f32 %v149, %v151
  %v153 = vadd.f32 %v149, %v152
  %vm154 = vweird.f32 %v148
  %vm155 = vweird.f32 %v149
  %vm156 = vmor %vm154, %vm155
  %v157 = vsel %vm156, %v149, %v153
  %v158 = vand.u32 2147483647, %v148
  %vm159 = vcmp.eq.f32.partialorder %v158, 8.507059e+37
  %v160 = vand.u32 %v148, 2147483648
  %v161 = vor.u32 1.1754944e-38, %v160
  %v162 = vsel %vm159, %v161, %v157
  %v163 = vmul.f32 1.0, %v162
  %v164 = vtanh.pop %v144
  %v165 = vmul.f32 %v163, %v110
  %167 = vrot.lane.b32.xlu0 %v164, 64
  %v168 = vpop.permute.xlu0 %167
  %v170 = vmul.f32 %v163, %v168
  %172 = vrot.lane.b32.xlu0 %v170, 32
  %v173 = vpop.permute.xlu0 %172
  %v175 = vadd.f32 %v165, %v173
  %v176 = vtanh.pop %v175
  %178 = vrot.lane.b32.xlu0 %v176, 64
  %v179 = vpop.permute.xlu0 %178
  %v181 = vmul.f32 %v163, %v179
  %s182 = scalar_lea.vmem %s0, 16
  %v183 = vld [vmem:[%s182] sm:$0xff]
  %185 = vrot.lane.b32.xlu0 %v181, 32
  %v186 = vpop.permute.xlu0 %185
  %v187 = vsel %vm55, %v186, 0
  %189 = vmatpush.msra.mxu0 0.0
  %190 = vmatpush.msra.mxu0 0.0
  %191 = vmatpush.msra.mxu0 0.0
  %192 = vmatpush.msra.mxu0 0.0
  %193 = vmatpush.msra.mxu0 0.0
  %194 = vmatpush.msra.mxu0 0.0
  %195 = vmatpush.msra.mxu0 0.0
  %196 = vmatpush.msra.mxu0 0.0
  %197 = vmatpush.msra.mxu0 0.0
  %198 = vmatpush.msra.mxu0 0.0
  %199 = vmatpush.msra.mxu0 0.0
  %200 = vmatpush.msra.mxu0 0.0
  %201 = vmatpush.msra.mxu0 %v26
  %202 = vmatpush.msra.mxu0 %v25
  %203 = vmatpush.msra.mxu0 %v24
  %204 = vmatpush.msra.mxu0 %v23
  %205 = vmatmul.f32.gmra.mxu0 %v187
  %v206 = vpop.f32.mrf.mxu0
  %v207 = vadd.f32 0.0, %v206
  %208 = vdwg.mxu0
  %v209 = vadd.f32 %v183, %v207
  %v210 = vxor.u32 %v209, 2147483648
  %v211 = vmul.f32 %v210, 1.442695
  %v212 = vpow.pop %v211
  %v213 = vadd.f32 %v212, 1.0
  %v214 = vrcp.pop %v213
  %v215 = vmul.f32 %v213, %v214
  %v216 = vsub.f32 1.0, %v215
  %v217 = vmul.f32 %v214, %v216
  %v218 = vadd.f32 %v214, %v217
  %vm219 = vweird.f32 %v213
  %vm220 = vweird.f32 %v214
  %vm221 = vmor %vm219, %vm220
  %v222 = vsel %vm221, %v214, %v218
  %v223 = vand.u32 2147483647, %v213
  %vm224 = vcmp.eq.f32.partialorder %v223, 8.507059e+37
  %v225 = vand.u32 %v213, 2147483648
  %v226 = vor.u32 1.1754944e-38, %v225
  %v227 = vsel %vm224, %v226, %v222
  %v228 = vmul.f32 1.0, %v227
  %v229 = vtanh.pop %v209
  %v230 = vmul.f32 %v228, %v175
  %232 = vrot.lane.b32.xlu0 %v229, 64
  %v233 = vpop.permute.xlu0 %232
  %v235 = vmul.f32 %v228, %v233
  %237 = vrot.lane.b32.xlu0 %v235, 32
  %v238 = vpop.permute.xlu0 %237
  %v240 = vadd.f32 %v230, %v238
  %v241 = vtanh.pop %v240
  %243 = vrot.lane.b32.xlu0 %v241, 64
  %v244 = vpop.permute.xlu0 %243
  %v246 = vmul.f32 %v228, %v244
  %s247 = scalar_lea.vmem %s0, 24
  %v248 = vld [vmem:[%s247] sm:$0xff]
  %250 = vrot.lane.b32.xlu0 %v246, 32
  %v251 = vpop.permute.xlu0 %250
  %v252 = vsel %vm55, %v251, 0
  %254 = vmatpush.msra.mxu0 0.0
  %255 = vmatpush.msra.mxu0 0.0
  %256 = vmatpush.msra.mxu0 0.0
  %257 = vmatpush.msra.mxu0 0.0
  %258 = vmatpush.msra.mxu0 0.0
  %259 = vmatpush.msra.mxu0 0.0
  %260 = vmatpush.msra.mxu0 0.0
  %261 = vmatpush.msra.mxu0 0.0
  %262 = vmatpush.msra.mxu0 0.0
  %263 = vmatpush.msra.mxu0 0.0
  %264 = vmatpush.msra.mxu0 0.0
  %265 = vmatpush.msra.mxu0 0.0
  %266 = vmatpush.msra.mxu0 %v26
  %267 = vmatpush.msra.mxu0 %v25
  %268 = vmatpush.msra.mxu0 %v24
  %269 = vmatpush.msra.mxu0 %v23
  %270 = vmatmul.f32.gmra.mxu0 %v252
  %v271 = vpop.f32.mrf.mxu0
  %v272 = vadd.f32 0.0, %v271
  %273 = vdwg.mxu0
  %v274 = vadd.f32 %v248, %v272
  %v275 = vxor.u32 %v274, 2147483648
  %v276 = vmul.f32 %v275, 1.442695
  %v277 = vpow.pop %v276
  %v278 = vadd.f32 %v277, 1.0
  %v279 = vrcp.pop %v278
  %v280 = vmul.f32 %v278, %v279
  %v281 = vsub.f32 1.0, %v280
  %v282 = vmul.f32 %v279, %v281
  %v283 = vadd.f32 %v279, %v282
  %vm284 = vweird.f32 %v278
  %vm285 = vweird.f32 %v279
  %vm286 = vmor %vm284, %vm285
  %v287 = vsel %vm286, %v279, %v283
  %v288 = vand.u32 2147483647, %v278
  %vm289 = vcmp.eq.f32.partialorder %v288, 8.507059e+37
  %v290 = vand.u32 %v278, 2147483648
  %v291 = vor.u32 1.1754944e-38, %v290
  %v292 = vsel %vm289, %v291, %v287
  %v293 = vmul.f32 1.0, %v292
  %v294 = vtanh.pop %v274
  %v295 = vmul.f32 %v293, %v240
  %297 = vrot.lane.b32.xlu0 %v294, 64
  %v298 = vpop.permute.xlu0 %297
  %v300 = vmul.f32 %v293, %v298
  %302 = vrot.lane.b32.xlu0 %v300, 32
  %v303 = vpop.permute.xlu0 %302
  %v305 = vadd.f32 %v295, %v303
  %v306 = vtanh.pop %v305
  %308 = vrot.lane.b32.xlu0 %v306, 64
  %v309 = vpop.permute.xlu0 %308
  %v311 = vmul.f32 %v293, %v309
  %s312 = scalar_lea.vmem %s0, 32
  %v313 = vld [vmem:[%s312] sm:$0xff]
  %315 = vrot.lane.b32.xlu0 %v311, 32
  %v316 = vpop.permute.xlu0 %315
  %v317 = vsel %vm55, %v316, 0
  %319 = vmatpush.msra.mxu0 0.0
  %320 = vmatpush.msra.mxu0 0.0
  %321 = vmatpush.msra.mxu0 0.0
  %322 = vmatpush.msra.mxu0 0.0
  %323 = vmatpush.msra.mxu0 0.0
  %324 = vmatpush.msra.mxu0 0.0
  %325 = vmatpush.msra.mxu0 0.0
  %326 = vmatpush.msra.mxu0 0.0
  %327 = vmatpush.msra.mxu0 0.0
  %328 = vmatpush.msra.mxu0 0.0
  %329 = vmatpush.msra.mxu0 0.0
  %330 = vmatpush.msra.mxu0 0.0
  %331 = vmatpush.msra.mxu0 %v26
  %332 = vmatpush.msra.mxu0 %v25
  %333 = vmatpush.msra.mxu0 %v24
  %334 = vmatpush.msra.mxu0 %v23
  %335 = vmatmul.f32.gmra.mxu0 %v317
  %v336 = vpop.f32.mrf.mxu0
  %v337 = vadd.f32 0.0, %v336
  %338 = vdwg.mxu0
  %v339 = vadd.f32 %v313, %v337
  %v340 = vxor.u32 %v339, 2147483648
  %v341 = vmul.f32 %v340, 1.442695
  %v342 = vpow.pop %v341
  %v343 = vadd.f32 %v342, 1.0
  %v344 = vrcp.pop %v343
  %v345 = vmul.f32 %v343, %v344
  %v346 = vsub.f32 1.0, %v345
  %v347 = vmul.f32 %v344, %v346
  %v348 = vadd.f32 %v344, %v347
  %vm349 = vweird.f32 %v343
  %vm350 = vweird.f32 %v344
  %vm351 = vmor %vm349, %vm350
  %v352 = vsel %vm351, %v344, %v348
  %v353 = vand.u32 2147483647, %v343
  %vm354 = vcmp.eq.f32.partialorder %v353, 8.507059e+37
  %v355 = vand.u32 %v343, 2147483648
  %v356 = vor.u32 1.1754944e-38, %v355
  %v357 = vsel %vm354, %v356, %v352
  %v358 = vmul.f32 1.0, %v357
  %v359 = vtanh.pop %v339
  %v360 = vmul.f32 %v358, %v305
  %362 = vrot.lane.b32.xlu0 %v359, 64
  %v363 = vpop.permute.xlu0 %362
  %v365 = vmul.f32 %v358, %v363
  %367 = vrot.lane.b32.xlu0 %v365, 32
  %v368 = vpop.permute.xlu0 %367
  %v370 = vadd.f32 %v360, %v368
  %v371 = vtanh.pop %v370
  %373 = vrot.lane.b32.xlu0 %v371, 64
  %v374 = vpop.permute.xlu0 %373
  %v376 = vmul.f32 %v358, %v374
  %v377 = vld [vmem:[%s2] sm:$0xff]
  %378 = vst [vmem:[%s6] sm:$0xff] 0.0
  %vm379 = vcmp.lt.s32.totalorder %v48, 32
  %v380 = vadd.s32 %v377, 32
  %381 = vset.pattern.permute.xlu0 0
  %382 = vperm.xlu0 %381, %v377
  %v383 = vpop.permute.xlu0 %382
  %384 = vset.pattern.permute.xlu0 1
  %385 = vperm.xlu0 %384, %v380
  %v386 = vpop.permute.xlu0 %385
  %v387 = vsel %vm379, %v383, %v386
  %vm388 = vcmp.eq.s32.totalorder %v48, %v387
  %v389 = vsel %vm388, 1.0, 0.0
  %391 = vrot.lane.b32.xlu0 %v376, 32
  %v392 = vpop.permute.xlu0 %391
  %v393 = vsel %vm55, %v392, 0
  %395 = vmatpush.msra.mxu0 0.0
  %396 = vmatpush.msra.mxu0 0.0
  %397 = vmatpush.msra.mxu0 0.0
  %398 = vmatpush.msra.mxu0 0.0
  %399 = vmatpush.msra.mxu0 0.0
  %400 = vmatpush.msra.mxu0 0.0
  %401 = vmatpush.msra.mxu0 0.0
  %402 = vmatpush.msra.mxu0 0.0
  %403 = vmatpush.msra.mxu0 0.0
  %404 = vmatpush.msra.mxu0 0.0
  %405 = vmatpush.msra.mxu0 0.0
  %406 = vmatpush.msra.mxu0 0.0
  %407 = vmatpush.msra.mxu0 %v38
  %408 = vmatpush.msra.mxu0 %v37
  %409 = vmatpush.msra.mxu0 %v36
  %410 = vmatpush.msra.mxu0 %v35
  %411 = vmatmul.f32.gmra.mxu0 %v393
  %v412 = vpop.f32.mrf.mxu0
  %v413 = vadd.f32 0.0, %v412
  %414 = vdwg.mxu0
  %vm415 = vcmask 523264
  %v417 = vsel %vm415, %v389, 0
  %419 = vmatpush.msra.mxu0 0.0
  %420 = vmatpush.msra.mxu0 0.0
  %421 = vmatpush.msra.mxu0 0.0
  %422 = vmatpush.msra.mxu0 0.0
  %423 = vmatpush.msra.mxu0 0.0
  %424 = vmatpush.msra.mxu0 0.0
  %425 = vmatpush.msra.mxu0 0.0
  %426 = vmatpush.msra.mxu0 0.0
  %427 = vmatpush.msra.mxu0 %v34
  %428 = vmatpush.msra.mxu0 %v33
  %429 = vmatpush.msra.mxu0 %v32
  %430 = vmatpush.msra.mxu0 %v31
  %431 = vmatpush.msra.mxu0 %v30
  %432 = vmatpush.msra.mxu0 %v29
  %433 = vmatpush.msra.mxu0 %v28
  %434 = vmatpush.msra.mxu0 %v27
  %435 = vmatmul.f32.gmra.mxu0 %v417
  %v436 = vpop.f32.mrf.mxu0
  %v437 = vadd.f32 %v413, %v436
  %438 = vdwg.mxu0
  %v439 = vxor.u32 %v437, 2147483648
  %v440 = vmul.f32 %v439, 1.442695
  %v441 = vpow.pop %v440
  %v442 = vadd.f32 %v441, 1.0
  %v443 = vrcp.pop %v442
  %v444 = vmul.f32 %v442, %v443
  %v445 = vsub.f32 1.0, %v444
  %v446 = vmul.f32 %v443, %v445
  %v447 = vadd.f32 %v443, %v446
  %vm448 = vweird.f32 %v442
  %vm449 = vweird.f32 %v443
  %vm450 = vmor %vm448, %vm449
  %v451 = vsel %vm450, %v443, %v447
  %v452 = vand.u32 2147483647, %v442
  %vm453 = vcmp.eq.f32.partialorder %v452, 8.507059e+37
  %v454 = vand.u32 %v442, 2147483648
  %v455 = vor.u32 1.1754944e-38, %v454
  %v456 = vsel %vm453, %v455, %v451
  %v457 = vmul.f32 1.0, %v456
  %v458 = vtanh.pop %v437
  %v459 = vmul.f32 %v457, %v370
  %461 = vrot.lane.b32.xlu0 %v458, 64
  %v462 = vpop.permute.xlu0 %461
  %v464 = vmul.f32 %v457, %v462
  %466 = vrot.lane.b32.xlu0 %v464, 32
  %v467 = vpop.permute.xlu0 %466
  %v469 = vadd.f32 %v459, %v467
  %v470 = vtanh.pop %v469
  %472 = vrot.lane.b32.xlu0 %v470, 64
  %v473 = vpop.permute.xlu0 %472
  %v475 = vmul.f32 %v457, %v473
  %477 = vrot.lane.b32.xlu0 %v475, 32
  %v478 = vpop.permute.xlu0 %477
  %v479 = vsel %vm55, %v478, 0
  %481 = vmatpush.msra.mxu0 0.0
  %482 = vmatpush.msra.mxu0 0.0
  %483 = vmatpush.msra.mxu0 0.0
  %484 = vmatpush.msra.mxu0 0.0
  %485 = vmatpush.msra.mxu0 0.0
  %486 = vmatpush.msra.mxu0 0.0
  %487 = vmatpush.msra.mxu0 0.0
  %488 = vmatpush.msra.mxu0 0.0
  %489 = vmatpush.msra.mxu0 0.0
  %490 = vmatpush.msra.mxu0 0.0
  %491 = vmatpush.msra.mxu0 0.0
  %492 = vmatpush.msra.mxu0 0.0
  %493 = vmatpush.msra.mxu0 %v42
  %494 = vmatpush.msra.mxu0 %v41
  %495 = vmatpush.msra.mxu0 %v40
  %496 = vmatpush.msra.mxu0 %v39
  %497 = vmatmul.f32.gmra.mxu0 %v479
  %v498 = vpop.f32.mrf.mxu0
  %v499 = vadd.f32 %v45, %v498
  %500 = vdwg.mxu0
  %s501 = scalar_lea.vmem %s6, 8
  %502 = vst [vmem:[%s501] sm:$0xff] %v499
  %v503 = vsel %vm50, %v499, -1e+30
  %v504 = vsel %vm53, %v499, -1e+30
  %505 = vmax.xlane.f32.xlu0 %v503
  %v506 = vpop.xlane.xlu0 %505
  %507 = vmax.xlane.f32.xlu0 %v504
  %v508 = vpop.xlane.xlu0 %507
  %vm509 = vcmp.eq.f32.partialorder %v503, %v506
  %vm510 = vmand %vm50, %vm509
  %v511 = vsel %vm510, %v49, 1e+09
  %512 = vmin.xlane.f32.xlu0 %v511
  %v513 = vpop.xlane.xlu0 %512
  %vm514 = vcmp.eq.f32.partialorder %v504, %v508
  %vm515 = vmand %vm53, %vm514
  %v516 = vsub.f32 %v49, 12.0
  %v517 = vsel %vm515, %v516, 1e+09
  %518 = vmin.xlane.f32.xlu0 %v517
  %v519 = vpop.xlane.xlu0 %518
  %v520 = vcvt.f32.s32.to.zero.pseudo %v519
  %v521 = vcvt.f32.s32.to.zero.pseudo %v513
  %v522 = vsel %vm379, 0, 32
  %vm523 = vcmp.eq.s32.totalorder %v48, %v522
  %v524 = vsel %vm523, 1.0, 0.0
  %525 = vmatpush.msra.mxu0 0.0
  %526 = vmatpush.msra.mxu0 0.0
  %527 = vmatpush.msra.mxu0 0.0
  %528 = vmatpush.msra.mxu0 0.0
  %529 = vmatpush.msra.mxu0 0.0
  %530 = vmatpush.msra.mxu0 0.0
  %531 = vmatpush.msra.mxu0 0.0
  %532 = vmatpush.msra.mxu0 0.0
  %533 = vmatpush.msra.mxu0 0.0
  %534 = vmatpush.msra.mxu0 0.0
  %535 = vmatpush.msra.mxu0 0.0
  %536 = vmatpush.msra.mxu0 0.0
  %537 = vmatpush.msra.mxu0 %v38
  %538 = vmatpush.msra.mxu0 %v37
  %539 = vmatpush.msra.mxu0 %v36
  %540 = vmatpush.msra.mxu0 %v35
  %541 = vmatmul.f32.gmra.mxu0 %v479
  %v542 = vpop.f32.mrf.mxu0
  %v543 = vadd.f32 0.0, %v542
  %544 = vdwg.mxu0
  %v546 = vsel %vm415, %v524, 0
  %548 = vmatpush.msra.mxu0 0.0
  %549 = vmatpush.msra.mxu0 0.0
  %550 = vmatpush.msra.mxu0 0.0
  %551 = vmatpush.msra.mxu0 0.0
  %552 = vmatpush.msra.mxu0 0.0
  %553 = vmatpush.msra.mxu0 0.0
  %554 = vmatpush.msra.mxu0 0.0
  %555 = vmatpush.msra.mxu0 0.0
  %556 = vmatpush.msra.mxu0 %v34
  %557 = vmatpush.msra.mxu0 %v33
  %558 = vmatpush.msra.mxu0 %v32
  %559 = vmatpush.msra.mxu0 %v31
  %560 = vmatpush.msra.mxu0 %v30
  %561 = vmatpush.msra.mxu0 %v29
  %562 = vmatpush.msra.mxu0 %v28
  %563 = vmatpush.msra.mxu0 %v27
  %564 = vmatmul.f32.gmra.mxu0 %v546
  %v565 = vpop.f32.mrf.mxu0
  %v566 = vadd.f32 %v543, %v565
  %567 = vdwg.mxu0
  %v568 = vxor.u32 %v566, 2147483648
  %v569 = vmul.f32 %v568, 1.442695
  %v570 = vpow.pop %v569
  %v571 = vadd.f32 %v570, 1.0
  %v572 = vrcp.pop %v571
  %v573 = vmul.f32 %v571, %v572
  %v574 = vsub.f32 1.0, %v573
  %v575 = vmul.f32 %v572, %v574
  %v576 = vadd.f32 %v572, %v575
  %vm577 = vweird.f32 %v571
  %vm578 = vweird.f32 %v572
  %vm579 = vmor %vm577, %vm578
  %v580 = vsel %vm579, %v572, %v576
  %v581 = vand.u32 2147483647, %v571
  %vm582 = vcmp.eq.f32.partialorder %v581, 8.507059e+37
  %v583 = vand.u32 %v571, 2147483648
  %v584 = vor.u32 1.1754944e-38, %v583
  %v585 = vsel %vm582, %v584, %v580
  %v586 = vmul.f32 1.0, %v585
  %v587 = vtanh.pop %v566
  %v588 = vmul.f32 %v586, %v469
  %590 = vrot.lane.b32.xlu0 %v587, 64
  %v591 = vpop.permute.xlu0 %590
  %v593 = vmul.f32 %v586, %v591
  %595 = vrot.lane.b32.xlu0 %v593, 32
  %v596 = vpop.permute.xlu0 %595
  %v598 = vadd.f32 %v588, %v596
  %v599 = vtanh.pop %v598
  %601 = vrot.lane.b32.xlu0 %v599, 64
  %v602 = vpop.permute.xlu0 %601
  %v604 = vmul.f32 %v586, %v602
  %606 = vrot.lane.b32.xlu0 %v604, 32
  %v607 = vpop.permute.xlu0 %606
  %v608 = vsel %vm55, %v607, 0
  %610 = vmatpush.msra.mxu0 0.0
  %611 = vmatpush.msra.mxu0 0.0
  %612 = vmatpush.msra.mxu0 0.0
  %613 = vmatpush.msra.mxu0 0.0
  %614 = vmatpush.msra.mxu0 0.0
  %615 = vmatpush.msra.mxu0 0.0
  %616 = vmatpush.msra.mxu0 0.0
  %617 = vmatpush.msra.mxu0 0.0
  %618 = vmatpush.msra.mxu0 0.0
  %619 = vmatpush.msra.mxu0 0.0
  %620 = vmatpush.msra.mxu0 0.0
  %621 = vmatpush.msra.mxu0 0.0
  %622 = vmatpush.msra.mxu0 %v42
  %623 = vmatpush.msra.mxu0 %v41
  %624 = vmatpush.msra.mxu0 %v40
  %625 = vmatpush.msra.mxu0 %v39
  %626 = vmatmul.f32.gmra.mxu0 %v608
  %v627 = vpop.f32.mrf.mxu0
  %v628 = vadd.f32 %v45, %v627
  %629 = vdwg.mxu0
  %s630 = scalar_lea.vmem %s6, 16
  %631 = vst [vmem:[%s630] sm:$0xff] %v628
  %v632 = vsel %vm50, %v628, -1e+30
  %v633 = vsel %vm53, %v628, -1e+30
  %634 = vmax.xlane.f32.xlu0 %v632
  %v635 = vpop.xlane.xlu0 %634
  %636 = vmax.xlane.f32.xlu0 %v633
  %v637 = vpop.xlane.xlu0 %636
  %vm638 = vcmp.eq.f32.partialorder %v632, %v635
  %vm639 = vmand %vm50, %vm638
  %v640 = vsel %vm639, %v49, 1e+09
  %641 = vmin.xlane.f32.xlu0 %v640
  %v642 = vpop.xlane.xlu0 %641
  %vm643 = vcmp.eq.f32.partialorder %v633, %v637
  %vm644 = vmand %vm53, %vm643
  %v645 = vsel %vm644, %v516, 1e+09
  %646 = vmin.xlane.f32.xlu0 %v645
  %v647 = vpop.xlane.xlu0 %646
  %v648 = vcvt.f32.s32.to.zero.pseudo %v647
  %v649 = vcvt.f32.s32.to.zero.pseudo %v642
  %v650 = vadd.s32 %v521, 32
  %v651 = vsel %vm379, %v520, %v650
  %vm652 = vcmp.eq.s32.totalorder %v48, %v651
  %v653 = vsel %vm652, 1.0, 0.0
  %654 = vmatpush.msra.mxu0 0.0
  %655 = vmatpush.msra.mxu0 0.0
  %656 = vmatpush.msra.mxu0 0.0
  %657 = vmatpush.msra.mxu0 0.0
  %658 = vmatpush.msra.mxu0 0.0
  %659 = vmatpush.msra.mxu0 0.0
  %660 = vmatpush.msra.mxu0 0.0
  %661 = vmatpush.msra.mxu0 0.0
  %662 = vmatpush.msra.mxu0 0.0
  %663 = vmatpush.msra.mxu0 0.0
  %664 = vmatpush.msra.mxu0 0.0
  %665 = vmatpush.msra.mxu0 0.0
  %666 = vmatpush.msra.mxu0 %v38
  %667 = vmatpush.msra.mxu0 %v37
  %668 = vmatpush.msra.mxu0 %v36
  %669 = vmatpush.msra.mxu0 %v35
  %670 = vmatmul.f32.gmra.mxu0 %v608
  %v671 = vpop.f32.mrf.mxu0
  %v672 = vadd.f32 0.0, %v671
  %673 = vdwg.mxu0
  %v675 = vsel %vm415, %v653, 0
  %677 = vmatpush.msra.mxu0 0.0
  %678 = vmatpush.msra.mxu0 0.0
  %679 = vmatpush.msra.mxu0 0.0
  %680 = vmatpush.msra.mxu0 0.0
  %681 = vmatpush.msra.mxu0 0.0
  %682 = vmatpush.msra.mxu0 0.0
  %683 = vmatpush.msra.mxu0 0.0
  %684 = vmatpush.msra.mxu0 0.0
  %685 = vmatpush.msra.mxu0 %v34
  %686 = vmatpush.msra.mxu0 %v33
  %687 = vmatpush.msra.mxu0 %v32
  %688 = vmatpush.msra.mxu0 %v31
  %689 = vmatpush.msra.mxu0 %v30
  %690 = vmatpush.msra.mxu0 %v29
  %691 = vmatpush.msra.mxu0 %v28
  %692 = vmatpush.msra.mxu0 %v27
  %693 = vmatmul.f32.gmra.mxu0 %v675
  %v694 = vpop.f32.mrf.mxu0
  %v695 = vadd.f32 %v672, %v694
  %696 = vdwg.mxu0
  %v697 = vxor.u32 %v695, 2147483648
  %v698 = vmul.f32 %v697, 1.442695
  %v699 = vpow.pop %v698
  %v700 = vadd.f32 %v699, 1.0
  %v701 = vrcp.pop %v700
  %v702 = vmul.f32 %v700, %v701
  %v703 = vsub.f32 1.0, %v702
  %v704 = vmul.f32 %v701, %v703
  %v705 = vadd.f32 %v701, %v704
  %vm706 = vweird.f32 %v700
  %vm707 = vweird.f32 %v701
  %vm708 = vmor %vm706, %vm707
  %v709 = vsel %vm708, %v701, %v705
  %v710 = vand.u32 2147483647, %v700
  %vm711 = vcmp.eq.f32.partialorder %v710, 8.507059e+37
  %v712 = vand.u32 %v700, 2147483648
  %v713 = vor.u32 1.1754944e-38, %v712
  %v714 = vsel %vm711, %v713, %v709
  %v715 = vmul.f32 1.0, %v714
  %v716 = vtanh.pop %v695
  %v717 = vmul.f32 %v715, %v598
  %719 = vrot.lane.b32.xlu0 %v716, 64
  %v720 = vpop.permute.xlu0 %719
  %v722 = vmul.f32 %v715, %v720
  %724 = vrot.lane.b32.xlu0 %v722, 32
  %v725 = vpop.permute.xlu0 %724
  %v727 = vadd.f32 %v717, %v725
  %v728 = vtanh.pop %v727
  %730 = vrot.lane.b32.xlu0 %v728, 64
  %v731 = vpop.permute.xlu0 %730
  %v733 = vmul.f32 %v715, %v731
  %735 = vrot.lane.b32.xlu0 %v733, 32
  %v736 = vpop.permute.xlu0 %735
  %v737 = vsel %vm55, %v736, 0
  %739 = vmatpush.msra.mxu0 0.0
  %740 = vmatpush.msra.mxu0 0.0
  %741 = vmatpush.msra.mxu0 0.0
  %742 = vmatpush.msra.mxu0 0.0
  %743 = vmatpush.msra.mxu0 0.0
  %744 = vmatpush.msra.mxu0 0.0
  %745 = vmatpush.msra.mxu0 0.0
  %746 = vmatpush.msra.mxu0 0.0
  %747 = vmatpush.msra.mxu0 0.0
  %748 = vmatpush.msra.mxu0 0.0
  %749 = vmatpush.msra.mxu0 0.0
  %750 = vmatpush.msra.mxu0 0.0
  %751 = vmatpush.msra.mxu0 %v42
  %752 = vmatpush.msra.mxu0 %v41
  %753 = vmatpush.msra.mxu0 %v40
  %754 = vmatpush.msra.mxu0 %v39
  %755 = vmatmul.f32.gmra.mxu0 %v737
  %v756 = vpop.f32.mrf.mxu0
  %v757 = vadd.f32 %v45, %v756
  %758 = vdwg.mxu0
  %s759 = scalar_lea.vmem %s6, 24
  %760 = vst [vmem:[%s759] sm:$0xff] %v757
  %v761 = vsel %vm50, %v757, -1e+30
  %v762 = vsel %vm53, %v757, -1e+30
  %763 = vmax.xlane.f32.xlu0 %v761
  %v764 = vpop.xlane.xlu0 %763
  %765 = vmax.xlane.f32.xlu0 %v762
  %v766 = vpop.xlane.xlu0 %765
  %vm767 = vcmp.eq.f32.partialorder %v761, %v764
  %vm768 = vmand %vm50, %vm767
  %v769 = vsel %vm768, %v49, 1e+09
  %770 = vmin.xlane.f32.xlu0 %v769
  %v771 = vpop.xlane.xlu0 %770
  %vm772 = vcmp.eq.f32.partialorder %v762, %v766
  %vm773 = vmand %vm53, %vm772
  %v774 = vsel %vm773, %v516, 1e+09
  %775 = vmin.xlane.f32.xlu0 %v774
  %v776 = vpop.xlane.xlu0 %775
  %v777 = vcvt.f32.s32.to.zero.pseudo %v776
  %v778 = vcvt.f32.s32.to.zero.pseudo %v771
  %v779 = vadd.s32 %v649, 32
  %v780 = vsel %vm379, %v648, %v779
  %vm781 = vcmp.eq.s32.totalorder %v48, %v780
  %v782 = vsel %vm781, 1.0, 0.0
  %783 = vmatpush.msra.mxu0 0.0
  %784 = vmatpush.msra.mxu0 0.0
  %785 = vmatpush.msra.mxu0 0.0
  %786 = vmatpush.msra.mxu0 0.0
  %787 = vmatpush.msra.mxu0 0.0
  %788 = vmatpush.msra.mxu0 0.0
  %789 = vmatpush.msra.mxu0 0.0
  %790 = vmatpush.msra.mxu0 0.0
  %791 = vmatpush.msra.mxu0 0.0
  %792 = vmatpush.msra.mxu0 0.0
  %793 = vmatpush.msra.mxu0 0.0
  %794 = vmatpush.msra.mxu0 0.0
  %795 = vmatpush.msra.mxu0 %v38
  %796 = vmatpush.msra.mxu0 %v37
  %797 = vmatpush.msra.mxu0 %v36
  %798 = vmatpush.msra.mxu0 %v35
  %799 = vmatmul.f32.gmra.mxu0 %v737
  %v800 = vpop.f32.mrf.mxu0
  %v801 = vadd.f32 0.0, %v800
  %802 = vdwg.mxu0
  %v804 = vsel %vm415, %v782, 0
  %806 = vmatpush.msra.mxu0 0.0
  %807 = vmatpush.msra.mxu0 0.0
  %808 = vmatpush.msra.mxu0 0.0
  %809 = vmatpush.msra.mxu0 0.0
  %810 = vmatpush.msra.mxu0 0.0
  %811 = vmatpush.msra.mxu0 0.0
  %812 = vmatpush.msra.mxu0 0.0
  %813 = vmatpush.msra.mxu0 0.0
  %814 = vmatpush.msra.mxu0 %v34
  %815 = vmatpush.msra.mxu0 %v33
  %816 = vmatpush.msra.mxu0 %v32
  %817 = vmatpush.msra.mxu0 %v31
  %818 = vmatpush.msra.mxu0 %v30
  %819 = vmatpush.msra.mxu0 %v29
  %820 = vmatpush.msra.mxu0 %v28
  %821 = vmatpush.msra.mxu0 %v27
  %822 = vmatmul.f32.gmra.mxu0 %v804
  %v823 = vpop.f32.mrf.mxu0
  %v824 = vadd.f32 %v801, %v823
  %825 = vdwg.mxu0
  %v826 = vxor.u32 %v824, 2147483648
  %v827 = vmul.f32 %v826, 1.442695
  %v828 = vpow.pop %v827
  %v829 = vadd.f32 %v828, 1.0
  %v830 = vrcp.pop %v829
  %v831 = vmul.f32 %v829, %v830
  %v832 = vsub.f32 1.0, %v831
  %v833 = vmul.f32 %v830, %v832
  %v834 = vadd.f32 %v830, %v833
  %vm835 = vweird.f32 %v829
  %vm836 = vweird.f32 %v830
  %vm837 = vmor %vm835, %vm836
  %v838 = vsel %vm837, %v830, %v834
  %v839 = vand.u32 2147483647, %v829
  %vm840 = vcmp.eq.f32.partialorder %v839, 8.507059e+37
  %v841 = vand.u32 %v829, 2147483648
  %v842 = vor.u32 1.1754944e-38, %v841
  %v843 = vsel %vm840, %v842, %v838
  %v844 = vmul.f32 1.0, %v843
  %v845 = vtanh.pop %v824
  %v846 = vmul.f32 %v844, %v727
  %848 = vrot.lane.b32.xlu0 %v845, 64
  %v849 = vpop.permute.xlu0 %848
  %v851 = vmul.f32 %v844, %v849
  %853 = vrot.lane.b32.xlu0 %v851, 32
  %v854 = vpop.permute.xlu0 %853
  %v856 = vadd.f32 %v846, %v854
  %v857 = vtanh.pop %v856
  %859 = vrot.lane.b32.xlu0 %v857, 64
  %v860 = vpop.permute.xlu0 %859
  %v862 = vmul.f32 %v844, %v860
  %864 = vrot.lane.b32.xlu0 %v862, 32
  %v865 = vpop.permute.xlu0 %864
  %v866 = vsel %vm55, %v865, 0
  %868 = vmatpush.msra.mxu0 0.0
  %869 = vmatpush.msra.mxu0 0.0
  %870 = vmatpush.msra.mxu0 0.0
  %871 = vmatpush.msra.mxu0 0.0
  %872 = vmatpush.msra.mxu0 0.0
  %873 = vmatpush.msra.mxu0 0.0
  %874 = vmatpush.msra.mxu0 0.0
  %875 = vmatpush.msra.mxu0 0.0
  %876 = vmatpush.msra.mxu0 0.0
  %877 = vmatpush.msra.mxu0 0.0
  %878 = vmatpush.msra.mxu0 0.0
  %879 = vmatpush.msra.mxu0 0.0
  %880 = vmatpush.msra.mxu0 %v42
  %881 = vmatpush.msra.mxu0 %v41
  %882 = vmatpush.msra.mxu0 %v40
  %883 = vmatpush.msra.mxu0 %v39
  %884 = vmatmul.f32.gmra.mxu0 %v866
  %v885 = vpop.f32.mrf.mxu0
  %v886 = vadd.f32 %v45, %v885
  %887 = vdwg.mxu0
  %s888 = scalar_lea.vmem %s6, 32
  %889 = vst [vmem:[%s888] sm:$0xff] %v886
  %v890 = vsel %vm50, %v886, -1e+30
  %v891 = vsel %vm53, %v886, -1e+30
  %892 = vmax.xlane.f32.xlu0 %v890
  %v893 = vpop.xlane.xlu0 %892
  %894 = vmax.xlane.f32.xlu0 %v891
  %v895 = vpop.xlane.xlu0 %894
  %vm896 = vcmp.eq.f32.partialorder %v890, %v893
  %vm897 = vmand %vm50, %vm896
  %v898 = vsel %vm897, %v49, 1e+09
  %899 = vmin.xlane.f32.xlu0 %v898
  %v900 = vpop.xlane.xlu0 %899
  %vm901 = vcmp.eq.f32.partialorder %v891, %v895
  %vm902 = vmand %vm53, %vm901
  %v903 = vsel %vm902, %v516, 1e+09
  %904 = vmin.xlane.f32.xlu0 %v903
  %v905 = vpop.xlane.xlu0 %904
  %v906 = vcvt.f32.s32.to.zero.pseudo %v905
  %v907 = vcvt.f32.s32.to.zero.pseudo %v900
  %v908 = vadd.s32 %v778, 32
  %v909 = vsel %vm379, %v777, %v908
  %vm910 = vcmp.eq.s32.totalorder %v48, %v909
  %v911 = vsel %vm910, 1.0, 0.0
  %912 = vmatpush.msra.mxu0 0.0
  %913 = vmatpush.msra.mxu0 0.0
  %914 = vmatpush.msra.mxu0 0.0
  %915 = vmatpush.msra.mxu0 0.0
  %916 = vmatpush.msra.mxu0 0.0
  %917 = vmatpush.msra.mxu0 0.0
  %918 = vmatpush.msra.mxu0 0.0
  %919 = vmatpush.msra.mxu0 0.0
  %920 = vmatpush.msra.mxu0 0.0
  %921 = vmatpush.msra.mxu0 0.0
  %922 = vmatpush.msra.mxu0 0.0
  %923 = vmatpush.msra.mxu0 0.0
  %924 = vmatpush.msra.mxu0 %v38
  %925 = vmatpush.msra.mxu0 %v37
  %926 = vmatpush.msra.mxu0 %v36
  %927 = vmatpush.msra.mxu0 %v35
  %928 = vmatmul.f32.gmra.mxu0 %v866
  %v929 = vpop.f32.mrf.mxu0
  %v930 = vadd.f32 0.0, %v929
  %931 = vdwg.mxu0
  %v933 = vsel %vm415, %v911, 0
  %935 = vmatpush.msra.mxu0 0.0
  %936 = vmatpush.msra.mxu0 0.0
  %937 = vmatpush.msra.mxu0 0.0
  %938 = vmatpush.msra.mxu0 0.0
  %939 = vmatpush.msra.mxu0 0.0
  %940 = vmatpush.msra.mxu0 0.0
  %941 = vmatpush.msra.mxu0 0.0
  %942 = vmatpush.msra.mxu0 0.0
  %943 = vmatpush.msra.mxu0 %v34
  %944 = vmatpush.msra.mxu0 %v33
  %945 = vmatpush.msra.mxu0 %v32
  %946 = vmatpush.msra.mxu0 %v31
  %947 = vmatpush.msra.mxu0 %v30
  %948 = vmatpush.msra.mxu0 %v29
  %949 = vmatpush.msra.mxu0 %v28
  %950 = vmatpush.msra.mxu0 %v27
  %951 = vmatmul.f32.gmra.mxu0 %v933
  %v952 = vpop.f32.mrf.mxu0
  %v953 = vadd.f32 %v930, %v952
  %954 = vdwg.mxu0
  %v955 = vxor.u32 %v953, 2147483648
  %v956 = vmul.f32 %v955, 1.442695
  %v957 = vpow.pop %v956
  %v958 = vadd.f32 %v957, 1.0
  %v959 = vrcp.pop %v958
  %v960 = vmul.f32 %v958, %v959
  %v961 = vsub.f32 1.0, %v960
  %v962 = vmul.f32 %v959, %v961
  %v963 = vadd.f32 %v959, %v962
  %vm964 = vweird.f32 %v958
  %vm965 = vweird.f32 %v959
  %vm966 = vmor %vm964, %vm965
  %v967 = vsel %vm966, %v959, %v963
  %v968 = vand.u32 2147483647, %v958
  %vm969 = vcmp.eq.f32.partialorder %v968, 8.507059e+37
  %v970 = vand.u32 %v958, 2147483648
  %v971 = vor.u32 1.1754944e-38, %v970
  %v972 = vsel %vm969, %v971, %v967
  %v973 = vmul.f32 1.0, %v972
  %v974 = vtanh.pop %v953
  %v975 = vmul.f32 %v973, %v856
  %977 = vrot.lane.b32.xlu0 %v974, 64
  %v978 = vpop.permute.xlu0 %977
  %v980 = vmul.f32 %v973, %v978
  %982 = vrot.lane.b32.xlu0 %v980, 32
  %v983 = vpop.permute.xlu0 %982
  %v985 = vadd.f32 %v975, %v983
  %v986 = vtanh.pop %v985
  %988 = vrot.lane.b32.xlu0 %v986, 64
  %v989 = vpop.permute.xlu0 %988
  %v991 = vmul.f32 %v973, %v989
  %993 = vrot.lane.b32.xlu0 %v991, 32
  %v994 = vpop.permute.xlu0 %993
  %v995 = vsel %vm55, %v994, 0
  %997 = vmatpush.msra.mxu0 0.0
  %998 = vmatpush.msra.mxu0 0.0
  %999 = vmatpush.msra.mxu0 0.0
  %1000 = vmatpush.msra.mxu0 0.0
  %1001 = vmatpush.msra.mxu0 0.0
  %1002 = vmatpush.msra.mxu0 0.0
  %1003 = vmatpush.msra.mxu0 0.0
  %1004 = vmatpush.msra.mxu0 0.0
  %1005 = vmatpush.msra.mxu0 0.0
  %1006 = vmatpush.msra.mxu0 0.0
  %1007 = vmatpush.msra.mxu0 0.0
  %1008 = vmatpush.msra.mxu0 0.0
  %1009 = vmatpush.msra.mxu0 %v42
  %1010 = vmatpush.msra.mxu0 %v41
  %1011 = vmatpush.msra.mxu0 %v40
  %1012 = vmatpush.msra.mxu0 %v39
  %1013 = vmatmul.f32.gmra.mxu0 %v995
  %v1014 = vpop.f32.mrf.mxu0
  %v1015 = vadd.f32 %v45, %v1014
  %1016 = vdwg.mxu0
  %s1017 = scalar_lea.vmem %s6, 40
  %1018 = vst [vmem:[%s1017] sm:$0xff] %v1015
  %v1019 = vadd.s32 %v907, 32
  %v1020 = vsel %vm379, %v906, %v1019
  %vm1021 = vcmp.eq.s32.totalorder %v48, %v1020
  %v1022 = vsel %vm1021, 1.0, 0.0
  %1023 = vmatpush.msra.mxu0 0.0
  %1024 = vmatpush.msra.mxu0 0.0
  %1025 = vmatpush.msra.mxu0 0.0
  %1026 = vmatpush.msra.mxu0 0.0
  %1027 = vmatpush.msra.mxu0 0.0
  %1028 = vmatpush.msra.mxu0 0.0
  %1029 = vmatpush.msra.mxu0 0.0
  %1030 = vmatpush.msra.mxu0 0.0
  %1031 = vmatpush.msra.mxu0 0.0
  %1032 = vmatpush.msra.mxu0 0.0
  %1033 = vmatpush.msra.mxu0 0.0
  %1034 = vmatpush.msra.mxu0 0.0
  %1035 = vmatpush.msra.mxu0 %v38
  %1036 = vmatpush.msra.mxu0 %v37
  %1037 = vmatpush.msra.mxu0 %v36
  %1038 = vmatpush.msra.mxu0 %v35
  %1039 = vmatmul.f32.gmra.mxu0 %v995
  %v1040 = vpop.f32.mrf.mxu0
  %v1041 = vadd.f32 0.0, %v1040
  %1042 = vdwg.mxu0
  %v1044 = vsel %vm415, %v1022, 0
  %1046 = vmatpush.msra.mxu0 0.0
  %1047 = vmatpush.msra.mxu0 0.0
  %1048 = vmatpush.msra.mxu0 0.0
  %1049 = vmatpush.msra.mxu0 0.0
  %1050 = vmatpush.msra.mxu0 0.0
  %1051 = vmatpush.msra.mxu0 0.0
  %1052 = vmatpush.msra.mxu0 0.0
  %1053 = vmatpush.msra.mxu0 0.0
  %1054 = vmatpush.msra.mxu0 %v34
  %1055 = vmatpush.msra.mxu0 %v33
  %1056 = vmatpush.msra.mxu0 %v32
  %1057 = vmatpush.msra.mxu0 %v31
  %1058 = vmatpush.msra.mxu0 %v30
  %1059 = vmatpush.msra.mxu0 %v29
  %1060 = vmatpush.msra.mxu0 %v28
  %1061 = vmatpush.msra.mxu0 %v27
  %1062 = vmatmul.f32.gmra.mxu0 %v1044
  %v1063 = vpop.f32.mrf.mxu0
  %v1064 = vadd.f32 %v1041, %v1063
  %1065 = vdwg.mxu0
  %v1066 = vxor.u32 %v1064, 2147483648
  %v1067 = vmul.f32 %v1066, 1.442695
  %v1068 = vpow.pop %v1067
  %v1069 = vadd.f32 %v1068, 1.0
  %v1070 = vrcp.pop %v1069
  %v1071 = vmul.f32 %v1069, %v1070
  %v1072 = vsub.f32 1.0, %v1071
  %v1073 = vmul.f32 %v1070, %v1072
  %v1074 = vadd.f32 %v1070, %v1073
  %vm1075 = vweird.f32 %v1069
  %vm1076 = vweird.f32 %v1070
  %vm1077 = vmor %vm1075, %vm1076
  %v1078 = vsel %vm1077, %v1070, %v1074
  %v1079 = vand.u32 2147483647, %v1069
  %vm1080 = vcmp.eq.f32.partialorder %v1079, 8.507059e+37
  %v1081 = vand.u32 %v1069, 2147483648
  %v1082 = vor.u32 1.1754944e-38, %v1081
  %v1083 = vsel %vm1080, %v1082, %v1078
  %v1084 = vmul.f32 1.0, %v1083
  %v1085 = vtanh.pop %v1064
  %v1086 = vmul.f32 %v1084, %v985
  %1088 = vrot.lane.b32.xlu0 %v1085, 64
  %v1089 = vpop.permute.xlu0 %1088
  %v1091 = vmul.f32 %v1084, %v1089
  %1093 = vrot.lane.b32.xlu0 %v1091, 32
  %v1094 = vpop.permute.xlu0 %1093
  %v1096 = vadd.f32 %v1086, %v1094
  %v1097 = vtanh.pop %v1096
  %1099 = vrot.lane.b32.xlu0 %v1097, 64
  %v1100 = vpop.permute.xlu0 %1099
  %v1102 = vmul.f32 %v1084, %v1100
  %1104 = vrot.lane.b32.xlu0 %v1102, 32
  %v1105 = vpop.permute.xlu0 %1104
  %v1106 = vsel %vm55, %v1105, 0
  %1108 = vmatpush.msra.mxu0 0.0
  %1109 = vmatpush.msra.mxu0 0.0
  %1110 = vmatpush.msra.mxu0 0.0
  %1111 = vmatpush.msra.mxu0 0.0
  %1112 = vmatpush.msra.mxu0 0.0
  %1113 = vmatpush.msra.mxu0 0.0
  %1114 = vmatpush.msra.mxu0 0.0
  %1115 = vmatpush.msra.mxu0 0.0
  %1116 = vmatpush.msra.mxu0 0.0
  %1117 = vmatpush.msra.mxu0 0.0
  %1118 = vmatpush.msra.mxu0 0.0
  %1119 = vmatpush.msra.mxu0 0.0
  %1120 = vmatpush.msra.mxu0 %v42
  %1121 = vmatpush.msra.mxu0 %v41
  %1122 = vmatpush.msra.mxu0 %v40
  %1123 = vmatpush.msra.mxu0 %v39
  %1124 = vmatmul.f32.gmra.mxu0 %v1106
  %v1125 = vpop.f32.mrf.mxu0
  %v1126 = vadd.f32 %v45, %v1125
  %1127 = vdwg.mxu0
  %s1128 = scalar_lea.vmem %s6, 48
  %1129 = vst [vmem:[%s1128] sm:$0xff] %v1126
  // Predicated region
  $region26: #{encoder_decoder_forward.1} parent=0 // pred_check
    _
  $region27: #{encoder_decoder_forward.1} parent=0 // pred_check_branch
    %1131 = sbr.rel (0) target = $region29
  $region28: #{encoder_decoder_forward.1} parent=0 // pred_region
    _
  $region29: #{encoder_decoder_forward.1} parent=0 // pred_fallthru
    _
  // Predicated region
  $region30: #{encoder_decoder_forward.1} parent=0 // pred_check
    _
  $region31: #{encoder_decoder_forward.1} parent=0 // pred_check_branch
    %1133 = sbr.rel (0) target = $region33
  $region32: #{encoder_decoder_forward.1} parent=0 // pred_region
    _
  $region33: #{encoder_decoder_forward.1} parent=0 // pred_fallthru
    _

</llo_original>
